<compile_context>
chip_gen: v7x
topology: tpu7x:2x2x1
jax: 0.10.0
libtpu: 0.0.40
codegen_flags: <defaults>
</compile_context>

<pallas_src>
import functools
import math

import jax
import jax.numpy as jnp
from jax import lax
from jax.experimental import pallas as pl
from jax.experimental.pallas import tpu as pltpu


# ---------------------------------------------------------------------------
# Kernel: per-(batch, row-tile) partial sums of every dense loss term.
#   packed row 0: sum |flow_640 - gt|                      (L1 @ full res)
#   packed row 1: sum sqrt(dx^2 + dy^2)                    (EPE)
#   packed row 2: sum (1-edge)[:, :-1] * |d flow / dx|     (smoothness, x)
#   packed row 3: sum (1-edge)[:-1, :] * |d flow / dy|     (smoothness, y)
#   packed row 4: sum |flow_640 - gt| * (edge > 0.5)       (edge-pres. num.)
#   packed row 5: sum (edge > 0.5)                         (edge-pres. den.)
#   packed row 6: sum |flow_160 - downsample(gt)/4|        (last tile only)
# ---------------------------------------------------------------------------
def _dense_loss_kernel(flow_ref, gt_ref, edge_ref, f160_ref, ah_ref, awt_ref,
                       out_ref, accw0_ref, accw1_ref, carry_ref):
    t = pl.program_id(1)
    nt = pl.num_programs(1)

    f = flow_ref[...][0]          # (2, TH, W) predicted flow_640 tile
    g = gt_ref[...][0]            # (2, TH, W) gt flow tile
    edge = edge_ref[...][0, 0]    # (TH, W)
    th = f.shape[1]

    # ---- per-batch reset of the dy-seam carry ------------------------------
    @pl.when(t == 0)
    def _():
        carry_ref[...] = jnp.zeros_like(carry_ref)

    # ---- dense pointwise losses (channel-combined reductions) --------------
    df0 = f[0] - g[0]
    df1 = f[1] - g[1]
    dsum = jnp.abs(df0) + jnp.abs(df1)                     # (TH, W)
    s_l1 = jnp.sum(dsum)
    s_epe = jnp.sum(jnp.sqrt(df0 * df0 + df1 * df1))
    edge_mask = (edge > 0.5).astype(jnp.float32)
    s_enum = jnp.sum(dsum * edge_mask)
    s_eden = jnp.sum(edge_mask)

    # ---- edge-aware smoothness ---------------------------------------------
    w_s = 1.0 - edge
    dx = jnp.abs(f[:, :, :-1] - f[:, :, 1:])               # (2, TH, W-1)
    sx = jnp.sum(w_s[:, :-1] * (dx[0] + dx[1]))
    dy = jnp.abs(f[:, :-1, :] - f[:, 1:, :])               # (2, TH-1, W)
    sy = jnp.sum(w_s[:-1, :] * (dy[0] + dy[1]))
    # dy seam with the previous row tile (carried rows; zeros at t == 0, so
    # the seam term vanishes on the first tile of each batch element).
    seam = jnp.sum(carry_ref[2:3, :] *
                   (jnp.abs(carry_ref[0:1, :] - f[0, 0:1, :]) +
                    jnp.abs(carry_ref[1:2, :] - f[1, 0:1, :])))
    sy = sy + seam
    # Carry this tile's last rows to the next tile (no halo DMA stream).
    carry_ref[0:1, :] = f[0, th - 1:th, :]
    carry_ref[1:2, :] = f[1, th - 1:th, :]
    carry_ref[2:3, :] = w_s[th - 1:th, :]

    # ---- fused quarter-res downsample: column pass for this tile -----------
    awt = awt_ref[...]                                                # (W, W4)
    x0 = jnp.dot(g[0], awt, preferred_element_type=jnp.float32)      # (TH, W4)
    x1 = jnp.dot(g[1], awt, preferred_element_type=jnp.float32)
    row0 = pl.multiple_of(t * th, th)
    accw0_ref[pl.ds(row0, th), :] = x0
    accw1_ref[pl.ds(row0, th), :] = x1

    # ---- pack per-step partial sums into a lane-dense (8, 128) block -------
    ridx = lax.broadcasted_iota(jnp.int32, (8, 128), 0)
    packed = jnp.zeros((8, 128), jnp.float32)
    for k, s in enumerate((s_l1, s_epe, sx, sy, s_enum, s_eden)):
        packed = jnp.where(ridx == k, s, packed)

    is_last = t == nt - 1

    @pl.when(is_last)
    def _():
        # Row pass of the separable bilinear downsample + L1 vs flow_160.
        ah = ah_ref[...]                                             # (H4, H)
        f160 = f160_ref[...][0]                                      # (2, H4, W4)
        g0 = jnp.dot(ah, accw0_ref[...],
                     preferred_element_type=jnp.float32) * 0.25
        g1 = jnp.dot(ah, accw1_ref[...],
                     preferred_element_type=jnp.float32) * 0.25
        s160 = jnp.sum(jnp.abs(f160[0] - g0)) + jnp.sum(jnp.abs(f160[1] - g1))
        out_ref[0, 0] = jnp.where(ridx == 6, s160, packed)

    @pl.when(jnp.logical_not(is_last))
    def _():
        out_ref[0, 0] = packed


# ---------------------------------------------------------------------------
# VMEM budgeting helpers (generation-aware).
# ---------------------------------------------------------------------------
def _vmem_capacity_bytes():
    try:
        cap = int(pltpu.get_tpu_info().vmem_capacity_bytes)
        if cap > 0:
            return cap
    except Exception:
        pass
    return 64 << 20          # conservative (v7x-sized) fallback


def _step_bytes(th, h, w, h4, w4):
    """Per-grid-step VMEM working set estimate (double-buffered inputs +
    ~3x elementwise temporaries + resident scratch)."""
    tile_in = 4 * 5 * th * w                      # flow(2) + gt(2) + edge(1)
    resident = 4 * (2 * h4 * w4 + h4 * h + w * w4)
    scratch = 4 * (2 * h * w4 + 8 * w)
    out = 4 * 8 * 128
    return 2 * (tile_in + resident + out) + 3 * tile_in + scratch


def _pick_row_tile(h, w, h4, w4, budget_bytes):
    """Largest multiple-of-8 divisor of H whose estimated step working set
    stays within the budget."""
    if h % 8 != 0:
        return h
    best = 8
    for th in range(8, h + 1, 8):
        if h % th == 0 and _step_bytes(th, h, w, h4, w4) <= budget_bytes:
            best = th
    return best


# ---------------------------------------------------------------------------
# Plain-JAX helpers: bilinear-interp matrices, census transform, warp taps.
# ---------------------------------------------------------------------------
def _bilinear_matrix(out_size, in_size):
    """1-D interp matrix matching F.interpolate(mode='bilinear',
    align_corners=True) along one axis."""
    m = [[0.0] * in_size for _ in range(out_size)]
    if out_size == 1:
        m[0][0] = 1.0
    else:
        scale = (in_size - 1) / (out_size - 1)
        for i in range(out_size):
            src = i * scale
            lo = min(int(math.floor(src)), in_size - 1)
            hi = min(lo + 1, in_size - 1)
            w1 = src - lo
            m[i][lo] += 1.0 - w1
            m[i][hi] += w1
    return jnp.asarray(m, dtype=jnp.float32)


def _census_transform_bf16(img, patch_size=3):
    """(center > neighbor) over a 3x3 neighbourhood, zero padding (F.pad).
    Stored as bfloat16: {0, 1} is exact in bf16 and halves HBM bytes."""
    B, C, H, W = img.shape
    ph = patch_size // 2
    padded = jnp.pad(img, ((0, 0), (0, 0), (ph, ph), (ph, ph)))
    feats = []
    for i in range(patch_size):
        for j in range(patch_size):
            if i == ph and j == ph:
                continue
            neighbor = padded[:, :, i:i + H, j:j + W]
            feats.append((img > neighbor).astype(jnp.bfloat16))
    return jnp.concatenate(feats, axis=1)          # [B, 8*C, H, W] bf16


def _warp_taps(flow, H, W):
    """4-tap bilinear sampling indices/weights for grid_sample(bilinear,
    padding_mode='border', align_corners=True) with grid = base + flow.
    Computed ONCE per flow and reused across all census channels.
    Returns idx (4, B, H*W) int32 and weights (4, B, H*W) float32."""
    B = flow.shape[0]
    xs = jnp.arange(W, dtype=jnp.float32)[None, None, :]
    ys = jnp.arange(H, dtype=jnp.float32)[None, :, None]
    gx = jnp.clip(flow[:, 0] + xs, 0.0, float(W - 1))          # (B, H, W)
    gy = jnp.clip(flow[:, 1] + ys, 0.0, float(H - 1))
    x0f = jnp.floor(gx)
    y0f = jnp.floor(gy)
    wx1 = gx - x0f
    wy1 = gy - y0f
    wx0 = 1.0 - wx1
    wy0 = 1.0 - wy1
    x0 = x0f.astype(jnp.int32)
    y0 = y0f.astype(jnp.int32)
    x1 = jnp.minimum(x0 + 1, W - 1)
    y1 = jnp.minimum(y0 + 1, H - 1)

    def flat(y, x):
        return (y * W + x).reshape(B, H * W)

    idx = jnp.stack([flat(y0, x0), flat(y0, x1), flat(y1, x0), flat(y1, x1)])
    wgt = jnp.stack([(wy0 * wx0).reshape(B, -1), (wy0 * wx1).reshape(B, -1),
                     (wy1 * wx0).reshape(B, -1), (wy1 * wx1).reshape(B, -1)])
    return idx, wgt


def _census_warp_l1(census_flat, idx_p, w_p, idx_g, w_g):
    """mean |warp(census, pred) - warp(census, gt)| without broadcasting the
    gather indices over the channel axis (per-image (H*W,) indices only)."""
    B, K, HW = census_flat.shape

    def per_image(cf, ip, wp, ig, wg):
        # cf: (K, HW) bf16; ip/ig: (4, HW) int32; wp/wg: (4, HW) f32
        d = jnp.zeros((K, HW), jnp.float32)
        for tap in range(4):
            d = d + jnp.take(cf, ip[tap], axis=1).astype(jnp.float32) * wp[tap][None, :]
            d = d - jnp.take(cf, ig[tap], axis=1).astype(jnp.float32) * wg[tap][None, :]
        return jnp.sum(jnp.abs(d))

    per = jax.vmap(per_image, in_axes=(0, 1, 1, 1, 1))(
        census_flat, idx_p, w_p, idx_g, w_g)
    return jnp.sum(per) / (B * K * HW)


# ---------------------------------------------------------------------------
# Wrapper: the FlowLoss.forward equivalent.
# ---------------------------------------------------------------------------
def flow_loss(pred_flows, gt_flow, img1,
              weights=(0.2, 0.4, 0.8, 1.0), census_weight=0.3,
              smooth_weight=0.5, edge_aware_weight=0.8,
              tile_rows=None, _allow_small_tiles=False):
    flow_160 = pred_flows['flow_160']
    flow_640 = pred_flows['flow_640']
    edge_map = pred_flows['edge_map']
    # TODO(synk): the edge_map=None (_improved_smoothness_loss) and img1=None
    # branches of forward() are not implemented; this covers the
    # edge_map-and-img1-provided path.

    B, _, H, W = gt_flow.shape
    H4, W4 = flow_160.shape[2], flow_160.shape[3]

    # ---- generation-aware tile / VMEM budgeting ----------------------------
    cap = _vmem_capacity_bytes()
    budget = max(8 << 20, cap // 8)

    if H % 8 != 0:
        TH = H
    elif tile_rows is None:
        TH = _pick_row_tile(H, W, H4, W4, budget)
    else:
        TH = int(tile_rows)
        if not _allow_small_tiles:
            TH = max(TH, min(H, 64))           # guard tiny production tiles
        if TH % 8 != 0 or H % TH != 0:
            TH = _pick_row_tile(H, W, H4, W4, budget)
    NT = H // TH

    est = _step_bytes(TH, H, W, H4, W4)
    vmem_limit = int(min(cap * 3 // 4, max(24 << 20, est + (8 << 20))))

    # Separable bilinear-downsample matrices (grid-invariant, resident in VMEM).
    ah = _bilinear_matrix(H4, H)               # (H4, H)
    awt = _bilinear_matrix(W4, W).T            # (W, W4)

    # ---- single fused dense-loss kernel ------------------------------------
    part = pl.pallas_call(
        _dense_loss_kernel,
        out_shape=jax.ShapeDtypeStruct((B, NT, 8, 128), jnp.float32),
        grid_spec=pltpu.PrefetchScalarGridSpec(
            num_scalar_prefetch=0,
            grid=(B, NT),
            in_specs=[
                pl.BlockSpec((1, 2, TH, W), lambda b, t: (b, 0, t, 0)),   # flow_640
                pl.BlockSpec((1, 2, TH, W), lambda b, t: (b, 0, t, 0)),   # gt_flow
                pl.BlockSpec((1, 1, TH, W), lambda b, t: (b, 0, t, 0)),   # edge_map
                pl.BlockSpec((1, 2, H4, W4), lambda b, t: (b, 0, 0, 0)),  # flow_160
                pl.BlockSpec((H4, H), lambda b, t: (0, 0)),               # ah
                pl.BlockSpec((W, W4), lambda b, t: (0, 0)),               # awt
            ],
            out_specs=pl.BlockSpec((1, 1, 8, 128), lambda b, t: (b, t, 0, 0)),
            scratch_shapes=[
                pltpu.VMEM((H, W4), jnp.float32),   # gt @ awt, channel 0
                pltpu.VMEM((H, W4), jnp.float32),   # gt @ awt, channel 1
                pltpu.VMEM((8, W), jnp.float32),    # dy-seam carry rows
            ],
        ),
        compiler_params=pltpu.CompilerParams(
            dimension_semantics=("parallel", "arbitrary"),
            vmem_limit_bytes=vmem_limit),
    )(flow_640, gt_flow, edge_map, flow_160, ah, awt)

    sums = jnp.sum(part[:, :, :, 0], axis=(0, 1))
    s640, s_epe, sx, sy, s_enum, s_eden, s160 = (sums[i] for i in range(7))

    # ---- normalization (matches the PyTorch means) --------------------------
    l1_160 = s160 / (B * 2 * H4 * W4)
    l1_640 = s640 / (B * 2 * H * W)
    epe = s_epe / (B * H * W)
    smooth_loss = sx / (B * 2 * H * (W - 1)) + sy / (B * 2 * (H - 1) * W)
    edge_aware_loss = s_enum / (s_eden + 1e-6)

    total = weights[2] * l1_160 + weights[3] * l1_640
    losses = {'l1_loss_160': l1_160, 'l1_loss_640': l1_640}

    # ---- census loss: bf16 census + shared-tap bilinear warps (XLA) --------
    if census_weight > 0:
        census = _census_transform_bf16(img1)                  # [B, 8C, H, W]
        census_flat = census.reshape(B, census.shape[1], H * W)
        idx_p, w_p = _warp_taps(flow_640, H, W)
        idx_g, w_g = _warp_taps(gt_flow, H, W)
        census_loss = _census_warp_l1(census_flat, idx_p, w_p, idx_g, w_g)
        losses['census_loss'] = census_loss
        total = total + census_weight * census_loss
    if smooth_weight > 0:
        losses['smooth_loss'] = smooth_loss
        total = total + smooth_weight * smooth_loss
    if edge_aware_weight > 0:
        losses['edge_aware_loss'] = edge_aware_loss
        total = total + edge_aware_weight * edge_aware_loss
    losses['epe'] = epe
    return total, losses


if __name__ == "__main__":
    key = jax.random.PRNGKey(0)
    k1, k2, k3, k4, k5 = jax.random.split(key, 5)
    B, C, H, W = 2, 3, 16, 16

    gt_flow = jax.random.normal(k1, (B, 2, H, W), jnp.float32) * 2.0
    flow_640 = jax.random.normal(k2, (B, 2, H, W), jnp.float32) * 2.0
    flow_160 = jax.random.normal(k3, (B, 2, H // 4, W // 4), jnp.float32) * 0.5
    edge_map = jax.random.uniform(k4, (B, 1, H, W), dtype=jnp.float32)
    img1 = jax.random.uniform(k5, (B, C, H, W), dtype=jnp.float32)

    pred_flows = {'flow_160': flow_160, 'flow_640': flow_640,
                  'edge_map': edge_map}

    # Multi-row-tile path (2 tiles/image): exercises the carried dy-seam and
    # the fused downsample accumulator.  Small-tile override is test-only.
    fn_tiled = jax.jit(functools.partial(flow_loss, tile_rows=8,
                                         _allow_small_tiles=True))
    total_a, losses_a = fn_tiled(pred_flows, gt_flow, img1)

    # Default auto-picked tiling (single tile at this small size).
    fn_auto = jax.jit(flow_loss)
    total_b, losses_b = fn_auto(pred_flows, gt_flow, img1)

    jax.block_until_ready((total_a, losses_a, total_b, losses_b))
    print("KERNEL_OK")
</pallas_src>

<mosaic_0001>
module attributes {stable_mosaic.version = 11 : i64} {
  func.func @_dense_loss_kernel(%arg0: i32, %arg1: i32, %arg2: memref<1x2x8x16xf32, #tpu.memory_space<vmem>>, %arg3: memref<1x2x8x16xf32, #tpu.memory_space<vmem>>, %arg4: memref<1x1x8x16xf32, #tpu.memory_space<vmem>>, %arg5: memref<1x2x4x4xf32, #tpu.memory_space<vmem>>, %arg6: memref<4x16xf32, #tpu.memory_space<vmem>>, %arg7: memref<16x4xf32, #tpu.memory_space<vmem>>, %arg8: memref<1x1x8x128xf32, #tpu.memory_space<vmem>>, %arg9: memref<16x4xf32, #tpu.memory_space<vmem>>, %arg10: memref<16x4xf32, #tpu.memory_space<vmem>>, %arg11: memref<8x16xf32, #tpu.memory_space<vmem>>) attributes {dimension_semantics = [#tpu.dimension_semantics<parallel>, #tpu.dimension_semantics<arbitrary>], iteration_bounds = array<i64: 2, 2>, scalar_prefetch = 0 : i64, scratch_operands = 3 : i64, tpu.core_type = #tpu.core_type<tc>, window_params = [{transform_indices = @transform_0, window_bounds = array<i64: 1, 2, 8, 16>}, {transform_indices = @transform_1, window_bounds = array<i64: 1, 2, 8, 16>}, {transform_indices = @transform_2, window_bounds = array<i64: 1, 1, 8, 16>}, {transform_indices = @transform_3, window_bounds = array<i64: 1, 2, 4, 4>}, {pipeline_mode = #tpu.pipeline_mode<synchronous>, transform_indices = @transform_4, window_bounds = array<i64: 4, 16>}, {pipeline_mode = #tpu.pipeline_mode<synchronous>, transform_indices = @transform_5, window_bounds = array<i64: 16, 4>}, {transform_indices = @transform_6, window_bounds = array<i64: 1, 1, 8, 128>}]} {
    %c0 = arith.constant 0 : index
    %c0_0 = arith.constant 0 : index
    %c0_1 = arith.constant 0 : index
    %c0_2 = arith.constant 0 : index
    %0 = vector.load %arg2[%c0, %c0_0, %c0_1, %c0_2] : memref<1x2x8x16xf32, #tpu.memory_space<vmem>>, vector<1x2x8x16xf32>
    %1 = vector.shape_cast %0 : vector<1x2x8x16xf32> to vector<2x8x16xf32>
    %c0_3 = arith.constant 0 : index
    %c0_4 = arith.constant 0 : index
    %c0_5 = arith.constant 0 : index
    %c0_6 = arith.constant 0 : index
    %2 = vector.load %arg3[%c0_3, %c0_4, %c0_5, %c0_6] : memref<1x2x8x16xf32, #tpu.memory_space<vmem>>, vector<1x2x8x16xf32>
    %3 = vector.shape_cast %2 : vector<1x2x8x16xf32> to vector<2x8x16xf32>
    %c0_7 = arith.constant 0 : index
    %c0_8 = arith.constant 0 : index
    %c0_9 = arith.constant 0 : index
    %c0_10 = arith.constant 0 : index
    %4 = vector.load %arg4[%c0_7, %c0_8, %c0_9, %c0_10] : memref<1x1x8x16xf32, #tpu.memory_space<vmem>>, vector<1x1x8x16xf32>
    %5 = vector.shape_cast %4 : vector<1x1x8x16xf32> to vector<8x16xf32>
    %c0_i32 = arith.constant 0 : i32
    %6 = arith.cmpi eq, %arg1, %c0_i32 : i32
    %7 = arith.extui %6 : i1 to i32
    %c0_i32_11 = arith.constant 0 : i32
    %8 = arith.cmpi ne, %7, %c0_i32_11 : i32
    scf.if %8 {
      %cst_41 = arith.constant 0.000000e+00 : f32
      %150 = vector.broadcast %cst_41 : f32 to vector<8x16xf32>
      %c0_42 = arith.constant 0 : index
      %c0_43 = arith.constant 0 : index
      %151 = vector.load %arg11[%c0_42, %c0_43] : memref<8x16xf32, #tpu.memory_space<vmem>>, vector<8x16xf32>
      tpu.vector_store %arg11[%c0_42, %c0_43], %150 {strides = array<i32>} : memref<8x16xf32, #tpu.memory_space<vmem>>, vector<8x16xf32>,
    } else {
    }
    %9 = vector.extract_strided_slice %1 {offsets = [0, 0, 0], sizes = [1, 8, 16], strides = [1, 1, 1]} : vector<2x8x16xf32> to vector<1x8x16xf32>
    %10 = vector.shape_cast %9 : vector<1x8x16xf32> to vector<8x16xf32>
    %11 = vector.extract_strided_slice %3 {offsets = [0, 0, 0], sizes = [1, 8, 16], strides = [1, 1, 1]} : vector<2x8x16xf32> to vector<1x8x16xf32>
    %12 = vector.shape_cast %11 : vector<1x8x16xf32> to vector<8x16xf32>
    %13 = arith.subf %10, %12 : vector<8x16xf32>
    %14 = vector.extract_strided_slice %1 {offsets = [1, 0, 0], sizes = [1, 8, 16], strides = [1, 1, 1]} : vector<2x8x16xf32> to vector<1x8x16xf32>
    %15 = vector.shape_cast %14 : vector<1x8x16xf32> to vector<8x16xf32>
    %16 = vector.extract_strided_slice %3 {offsets = [1, 0, 0], sizes = [1, 8, 16], strides = [1, 1, 1]} : vector<2x8x16xf32> to vector<1x8x16xf32>
    %17 = vector.shape_cast %16 : vector<1x8x16xf32> to vector<8x16xf32>
    %18 = arith.subf %15, %17 : vector<8x16xf32>
    %19 = math.absf %13 : vector<8x16xf32>
    %20 = math.absf %18 : vector<8x16xf32>
    %21 = arith.addf %19, %20 : vector<8x16xf32>
    %22 = vector.shape_cast %21 : vector<8x16xf32> to vector<1x8x16xf32>
    %cst = arith.constant dense<0.000000e+00> : vector<1xf32>
    %23 = vector.multi_reduction <add>, %22, %cst [1, 2] : vector<1x8x16xf32> to vector<1xf32>
    %24 = vector.shape_cast %23 : vector<1xf32> to vector<1x1x1xf32>
    %25 = vector.extract %24[0, 0, 0] : f32 from vector<1x1x1xf32>
    %26 = arith.mulf %13, %13 : vector<8x16xf32>
    %27 = arith.mulf %18, %18 : vector<8x16xf32>
    %28 = arith.addf %26, %27 : vector<8x16xf32>
    %29 = math.sqrt %28 : vector<8x16xf32>
    %30 = vector.shape_cast %29 : vector<8x16xf32> to vector<1x8x16xf32>
    %cst_12 = arith.constant dense<0.000000e+00> : vector<1xf32>
    %31 = vector.multi_reduction <add>, %30, %cst_12 [1, 2] : vector<1x8x16xf32> to vector<1xf32>
    %32 = vector.shape_cast %31 : vector<1xf32> to vector<1x1x1xf32>
    %33 = vector.extract %32[0, 0, 0] : f32 from vector<1x1x1xf32>
    %cst_13 = arith.constant 5.000000e-01 : f32
    %34 = vector.broadcast %cst_13 : f32 to vector<8x16xf32>
    %35 = arith.cmpf ogt, %5, %34 : vector<8x16xf32>
    %36 = arith.extui %35 : vector<8x16xi1> to vector<8x16xi32>
    %37 = arith.sitofp %36 : vector<8x16xi32> to vector<8x16xf32>
    %38 = arith.mulf %21, %37 : vector<8x16xf32>
    %39 = vector.shape_cast %38 : vector<8x16xf32> to vector<1x8x16xf32>
    %cst_14 = arith.constant dense<0.000000e+00> : vector<1xf32>
    %40 = vector.multi_reduction <add>, %39, %cst_14 [1, 2] : vector<1x8x16xf32> to vector<1xf32>
    %41 = vector.shape_cast %40 : vector<1xf32> to vector<1x1x1xf32>
    %42 = vector.extract %41[0, 0, 0] : f32 from vector<1x1x1xf32>
    %43 = vector.shape_cast %37 : vector<8x16xf32> to vector<1x8x16xf32>
    %cst_15 = arith.constant dense<0.000000e+00> : vector<1xf32>
    %44 = vector.multi_reduction <add>, %43, %cst_15 [1, 2] : vector<1x8x16xf32> to vector<1xf32>
    %45 = vector.shape_cast %44 : vector<1xf32> to vector<1x1x1xf32>
    %46 = vector.extract %45[0, 0, 0] : f32 from vector<1x1x1xf32>
    %cst_16 = arith.constant 1.000000e+00 : f32
    %47 = vector.broadcast %cst_16 : f32 to vector<8x16xf32>
    %48 = arith.subf %47, %5 : vector<8x16xf32>
    %49 = vector.extract_strided_slice %1 {offsets = [0, 0, 0], sizes = [2, 8, 15], strides = [1, 1, 1]} : vector<2x8x16xf32> to vector<2x8x15xf32>
    %50 = vector.extract_strided_slice %1 {offsets = [0, 0, 1], sizes = [2, 8, 15], strides = [1, 1, 1]} : vector<2x8x16xf32> to vector<2x8x15xf32>
    %51 = arith.subf %49, %50 : vector<2x8x15xf32>
    %52 = math.absf %51 : vector<2x8x15xf32>
    %53 = vector.extract_strided_slice %48 {offsets = [0, 0], sizes = [8, 15], strides = [1, 1]} : vector<8x16xf32> to vector<8x15xf32>
    %54 = vector.extract_strided_slice %52 {offsets = [0, 0, 0], sizes = [1, 8, 15], strides = [1, 1, 1]} : vector<2x8x15xf32> to vector<1x8x15xf32>
    %55 = vector.shape_cast %54 : vector<1x8x15xf32> to vector<8x15xf32>
    %56 = vector.extract_strided_slice %52 {offsets = [1, 0, 0], sizes = [1, 8, 15], strides = [1, 1, 1]} : vector<2x8x15xf32> to vector<1x8x15xf32>
    %57 = vector.shape_cast %56 : vector<1x8x15xf32> to vector<8x15xf32>
    %58 = arith.addf %55, %57 : vector<8x15xf32>
    %59 = arith.mulf %53, %58 : vector<8x15xf32>
    %60 = vector.shape_cast %59 : vector<8x15xf32> to vector<1x8x15xf32>
    %cst_17 = arith.constant dense<0.000000e+00> : vector<1xf32>
    %61 = vector.multi_reduction <add>, %60, %cst_17 [1, 2] : vector<1x8x15xf32> to vector<1xf32>
    %62 = vector.shape_cast %61 : vector<1xf32> to vector<1x1x1xf32>
    %63 = vector.extract %62[0, 0, 0] : f32 from vector<1x1x1xf32>
    %64 = vector.extract_strided_slice %1 {offsets = [0, 0, 0], sizes = [2, 7, 16], strides = [1, 1, 1]} : vector<2x8x16xf32> to vector<2x7x16xf32>
    %65 = vector.extract_strided_slice %1 {offsets = [0, 1, 0], sizes = [2, 7, 16], strides = [1, 1, 1]} : vector<2x8x16xf32> to vector<2x7x16xf32>
    %66 = arith.subf %64, %65 : vector<2x7x16xf32>
    %67 = math.absf %66 : vector<2x7x16xf32>
    %68 = vector.extract_strided_slice %48 {offsets = [0, 0], sizes = [7, 16], strides = [1, 1]} : vector<8x16xf32> to vector<7x16xf32>
    %69 = vector.extract_strided_slice %67 {offsets = [0, 0, 0], sizes = [1, 7, 16], strides = [1, 1, 1]} : vector<2x7x16xf32> to vector<1x7x16xf32>
    %70 = vector.shape_cast %69 : vector<1x7x16xf32> to vector<7x16xf32>
    %71 = vector.extract_strided_slice %67 {offsets = [1, 0, 0], sizes = [1, 7, 16], strides = [1, 1, 1]} : vector<2x7x16xf32> to vector<1x7x16xf32>
    %72 = vector.shape_cast %71 : vector<1x7x16xf32> to vector<7x16xf32>
    %73 = arith.addf %70, %72 : vector<7x16xf32>
    %74 = arith.mulf %68, %73 : vector<7x16xf32>
    %75 = vector.shape_cast %74 : vector<7x16xf32> to vector<1x7x16xf32>
    %cst_18 = arith.constant dense<0.000000e+00> : vector<1xf32>
    %76 = vector.multi_reduction <add>, %75, %cst_18 [1, 2] : vector<1x7x16xf32> to vector<1xf32>
    %77 = vector.shape_cast %76 : vector<1xf32> to vector<1x1x1xf32>
    %78 = vector.extract %77[0, 0, 0] : f32 from vector<1x1x1xf32>
    %c2 = arith.constant 2 : index
    %c0_19 = arith.constant 0 : index
    %79 = vector.load %arg11[%c2, %c0_19] : memref<8x16xf32, #tpu.memory_space<vmem>>, vector<1x16xf32>
    %c0_20 = arith.constant 0 : index
    %c0_21 = arith.constant 0 : index
    %80 = vector.load %arg11[%c0_20, %c0_21] : memref<8x16xf32, #tpu.memory_space<vmem>>, vector<1x16xf32>
    %81 = vector.extract_strided_slice %1 {offsets = [0, 0, 0], sizes = [1, 1, 16], strides = [1, 1, 1]} : vector<2x8x16xf32> to vector<1x1x16xf32>
    %82 = vector.shape_cast %81 : vector<1x1x16xf32> to vector<1x16xf32>
    %83 = arith.subf %80, %82 : vector<1x16xf32>
    %84 = math.absf %83 : vector<1x16xf32>
    %c1 = arith.constant 1 : index
    %c0_22 = arith.constant 0 : index
    %85 = vector.load %arg11[%c1, %c0_22] : memref<8x16xf32, #tpu.memory_space<vmem>>, vector<1x16xf32>
    %86 = vector.extract_strided_slice %1 {offsets = [1, 0, 0], sizes = [1, 1, 16], strides = [1, 1, 1]} : vector<2x8x16xf32> to vector<1x1x16xf32>
    %87 = vector.shape_cast %86 : vector<1x1x16xf32> to vector<1x16xf32>
    %88 = arith.subf %85, %87 : vector<1x16xf32>
    %89 = math.absf %88 : vector<1x16xf32>
    %90 = arith.addf %84, %89 : vector<1x16xf32>
    %91 = arith.mulf %79, %90 : vector<1x16xf32>
    %92 = vector.shape_cast %91 : vector<1x16xf32> to vector<1x1x16xf32>
    %cst_23 = arith.constant dense<0.000000e+00> : vector<1xf32>
    %93 = vector.multi_reduction <add>, %92, %cst_23 [1, 2] : vector<1x1x16xf32> to vector<1xf32>
    %94 = vector.shape_cast %93 : vector<1xf32> to vector<1x1x1xf32>
    %95 = vector.extract %94[0, 0, 0] : f32 from vector<1x1x1xf32>
    %96 = arith.addf %78, %95 : f32
    %97 = vector.extract_strided_slice %1 {offsets = [0, 7, 0], sizes = [1, 1, 16], strides = [1, 1, 1]} : vector<2x8x16xf32> to vector<1x1x16xf32>
    %98 = vector.shape_cast %97 : vector<1x1x16xf32> to vector<1x16xf32>
    %c0_24 = arith.constant 0 : index
    %c0_25 = arith.constant 0 : index
    %99 = vector.load %arg11[%c0_24, %c0_25] : memref<8x16xf32, #tpu.memory_space<vmem>>, vector<1x16xf32>
    tpu.vector_store %arg11[%c0_24, %c0_25], %98 {strides = array<i32>} : memref<8x16xf32, #tpu.memory_space<vmem>>, vector<1x16xf32>,
    %100 = vector.extract_strided_slice %1 {offsets = [1, 7, 0], sizes = [1, 1, 16], strides = [1, 1, 1]} : vector<2x8x16xf32> to vector<1x1x16xf32>
    %101 = vector.shape_cast %100 : vector<1x1x16xf32> to vector<1x16xf32>
    %c1_26 = arith.constant 1 : index
    %c0_27 = arith.constant 0 : index
    %102 = vector.load %arg11[%c1_26, %c0_27] : memref<8x16xf32, #tpu.memory_space<vmem>>, vector<1x16xf32>
    tpu.vector_store %arg11[%c1_26, %c0_27], %101 {strides = array<i32>} : memref<8x16xf32, #tpu.memory_space<vmem>>, vector<1x16xf32>,
    %103 = vector.extract_strided_slice %48 {offsets = [7, 0], sizes = [1, 16], strides = [1, 1]} : vector<8x16xf32> to vector<1x16xf32>
    %c2_28 = arith.constant 2 : index
    %c0_29 = arith.constant 0 : index
    %104 = vector.load %arg11[%c2_28, %c0_29] : memref<8x16xf32, #tpu.memory_space<vmem>>, vector<1x16xf32>
    tpu.vector_store %arg11[%c2_28, %c0_29], %103 {strides = array<i32>} : memref<8x16xf32, #tpu.memory_space<vmem>>, vector<1x16xf32>,
    %c0_30 = arith.constant 0 : index
    %c0_31 = arith.constant 0 : index
    %105 = vector.load %arg7[%c0_30, %c0_31] : memref<16x4xf32, #tpu.memory_space<vmem>>, vector<16x4xf32>
    %106 = vector.extract_strided_slice %3 {offsets = [0, 0, 0], sizes = [1, 8, 16], strides = [1, 1, 1]} : vector<2x8x16xf32> to vector<1x8x16xf32>
    %107 = vector.shape_cast %106 : vector<1x8x16xf32> to vector<8x16xf32>
    %cst_32 = arith.constant dense<0.000000e+00> : vector<8x4xf32>
    %108 = tpu.matmul %107, %105, %cst_32 {dimension_numbers = #tpu.dot_dimension_numbers<[1], [0], [0], [1], [0, 0, 1, 1], [], []>} : vector<8x16xf32>, vector<16x4xf32>, vector<8x4xf32> -> vector<8x4xf32>
    %109 = vector.extract_strided_slice %3 {offsets = [1, 0, 0], sizes = [1, 8, 16], strides = [1, 1, 1]} : vector<2x8x16xf32> to vector<1x8x16xf32>
    %110 = vector.shape_cast %109 : vector<1x8x16xf32> to vector<8x16xf32>
    %cst_33 = arith.constant dense<0.000000e+00> : vector<8x4xf32>
    %111 = tpu.matmul %110, %105, %cst_33 {dimension_numbers = #tpu.dot_dimension_numbers<[1], [0], [0], [1], [0, 0, 1, 1], [], []>} : vector<8x16xf32>, vector<16x4xf32>, vector<8x4xf32> -> vector<8x4xf32>
    %c8_i32 = arith.constant 8 : i32
    %112 = arith.muli %arg1, %c8_i32 : i32
    %113 = tpu.assume_multiple %112, 8 : i32
    %114 = arith.index_cast %113 : i32 to index
    %c0_34 = arith.constant 0 : index
    %115 = vector.load %arg9[%114, %c0_34] : memref<16x4xf32, #tpu.memory_space<vmem>>, vector<8x4xf32>
    tpu.vector_store %arg9[%114, %c0_34], %108 {strides = array<i32>} : memref<16x4xf32, #tpu.memory_space<vmem>>, vector<8x4xf32>,
    %116 = arith.index_cast %113 : i32 to index
    %c0_35 = arith.constant 0 : index
    %117 = vector.load %arg10[%116, %c0_35] : memref<16x4xf32, #tpu.memory_space<vmem>>, vector<8x4xf32>
    tpu.vector_store %arg10[%116, %c0_35], %111 {strides = array<i32>} : memref<16x4xf32, #tpu.memory_space<vmem>>, vector<8x4xf32>,
    %118 = tpu.iota {dimensions = array<i32: 0>} : vector<8x128xi32>
    %cst_36 = arith.constant 0.000000e+00 : f32
    %119 = vector.broadcast %cst_36 : f32 to vector<8x128xf32>
    %c0_i32_37 = arith.constant 0 : i32
    %120 = vector.broadcast %c0_i32_37 : i32 to vector<8x128xi32>
    %121 = arith.cmpi eq, %118, %120 : vector<8x128xi32>
    %122 = vector.broadcast %25 : f32 to vector<8x128xf32>
    %123 = arith.select %121, %122, %119 : vector<8x128xi1>, vector<8x128xf32>
    %c1_i32 = arith.constant 1 : i32
    %124 = vector.broadcast %c1_i32 : i32 to vector<8x128xi32>
    %125 = arith.cmpi eq, %118, %124 : vector<8x128xi32>
    %126 = vector.broadcast %33 : f32 to vector<8x128xf32>
    %127 = arith.select %125, %126, %123 : vector<8x128xi1>, vector<8x128xf32>
    %c2_i32 = arith.constant 2 : i32
    %128 = vector.broadcast %c2_i32 : i32 to vector<8x128xi32>
    %129 = arith.cmpi eq, %118, %128 : vector<8x128xi32>
    %130 = vector.broadcast %63 : f32 to vector<8x128xf32>
    %131 = arith.select %129, %130, %127 : vector<8x128xi1>, vector<8x128xf32>
    %c3_i32 = arith.constant 3 : i32
    %132 = vector.broadcast %c3_i32 : i32 to vector<8x128xi32>
    %133 = arith.cmpi eq, %118, %132 : vector<8x128xi32>
    %134 = vector.broadcast %96 : f32 to vector<8x128xf32>
    %135 = arith.select %133, %134, %131 : vector<8x128xi1>, vector<8x128xf32>
    %c4_i32 = arith.constant 4 : i32
    %136 = vector.broadcast %c4_i32 : i32 to vector<8x128xi32>
    %137 = arith.cmpi eq, %118, %136 : vector<8x128xi32>
    %138 = vector.broadcast %42 : f32 to vector<8x128xf32>
    %139 = arith.select %137, %138, %135 : vector<8x128xi1>, vector<8x128xf32>
    %c5_i32 = arith.constant 5 : i32
    %140 = vector.broadcast %c5_i32 : i32 to vector<8x128xi32>
    %141 = arith.cmpi eq, %118, %140 : vector<8x128xi32>
    %142 = vector.broadcast %46 : f32 to vector<8x128xf32>
    %143 = arith.select %141, %142, %139 : vector<8x128xi1>, vector<8x128xf32>
    %c1_i32_38 = arith.constant 1 : i32
    %144 = arith.cmpi eq, %arg1, %c1_i32_38 : i32
    %145 = arith.extui %144 : i1 to i32
    %c0_i32_39 = arith.constant 0 : i32
    %146 = arith.cmpi ne, %145, %c0_i32_39 : i32
    scf.if %146 {
      %c0_41 = arith.constant 0 : index
      %c0_42 = arith.constant 0 : index
      %150 = vector.load %arg6[%c0_41, %c0_42] : memref<4x16xf32, #tpu.memory_space<vmem>>, vector<4x16xf32>
      %c0_43 = arith.constant 0 : index
      %c0_44 = arith.constant 0 : index
      %c0_45 = arith.constant 0 : index
      %c0_46 = arith.constant 0 : index
      %151 = vector.load %arg5[%c0_43, %c0_44, %c0_45, %c0_46] : memref<1x2x4x4xf32, #tpu.memory_space<vmem>>, vector<1x2x4x4xf32>
      %152 = vector.shape_cast %151 : vector<1x2x4x4xf32> to vector<2x4x4xf32>
      %c0_47 = arith.constant 0 : index
      %c0_48 = arith.constant 0 : index
      %153 = vector.load %arg9[%c0_47, %c0_48] : memref<16x4xf32, #tpu.memory_space<vmem>>, vector<16x4xf32>
      %cst_49 = arith.constant dense<0.000000e+00> : vector<4x4xf32>
      %154 = tpu.matmul %150, %153, %cst_49 {dimension_numbers = #tpu.dot_dimension_numbers<[1], [0], [0], [1], [0, 0, 1, 1], [], []>} : vector<4x16xf32>, vector<16x4xf32>, vector<4x4xf32> -> vector<4x4xf32>
      %cst_50 = arith.constant 2.500000e-01 : f32
      %155 = vector.broadcast %cst_50 : f32 to vector<4x4xf32>
      %156 = arith.mulf %154, %155 : vector<4x4xf32>
      %c0_51 = arith.constant 0 : index
      %c0_52 = arith.constant 0 : index
      %157 = vector.load %arg10[%c0_51, %c0_52] : memref<16x4xf32, #tpu.memory_space<vmem>>, vector<16x4xf32>
      %cst_53 = arith.constant dense<0.000000e+00> : vector<4x4xf32>
      %158 = tpu.matmul %150, %157, %cst_53 {dimension_numbers = #tpu.dot_dimension_numbers<[1], [0], [0], [1], [0, 0, 1, 1], [], []>} : vector<4x16xf32>, vector<16x4xf32>, vector<4x4xf32> -> vector<4x4xf32>
      %cst_54 = arith.constant 2.500000e-01 : f32
      %159 = vector.broadcast %cst_54 : f32 to vector<4x4xf32>
      %160 = arith.mulf %158, %159 : vector<4x4xf32>
      %161 = vector.extract_strided_slice %152 {offsets = [0, 0, 0], sizes = [1, 4, 4], strides = [1, 1, 1]} : vector<2x4x4xf32> to vector<1x4x4xf32>
      %162 = vector.shape_cast %161 : vector<1x4x4xf32> to vector<4x4xf32>
      %163 = arith.subf %162, %156 : vector<4x4xf32>
      %164 = math.absf %163 : vector<4x4xf32>
      %165 = vector.shape_cast %164 : vector<4x4xf32> to vector<1x4x4xf32>
      %cst_55 = arith.constant dense<0.000000e+00> : vector<1xf32>
      %166 = vector.multi_reduction <add>, %165, %cst_55 [1, 2] : vector<1x4x4xf32> to vector<1xf32>
      %167 = vector.shape_cast %166 : vector<1xf32> to vector<1x1x1xf32>
      %168 = vector.extract %167[0, 0, 0] : f32 from vector<1x1x1xf32>
      %169 = vector.extract_strided_slice %152 {offsets = [1, 0, 0], sizes = [1, 4, 4], strides = [1, 1, 1]} : vector<2x4x4xf32> to vector<1x4x4xf32>
      %170 = vector.shape_cast %169 : vector<1x4x4xf32> to vector<4x4xf32>
      %171 = arith.subf %170, %160 : vector<4x4xf32>
      %172 = math.absf %171 : vector<4x4xf32>
      %173 = vector.shape_cast %172 : vector<4x4xf32> to vector<1x4x4xf32>
      %cst_56 = arith.constant dense<0.000000e+00> : vector<1xf32>
      %174 = vector.multi_reduction <add>, %173, %cst_56 [1, 2] : vector<1x4x4xf32> to vector<1xf32>
      %175 = vector.shape_cast %174 : vector<1xf32> to vector<1x1x1xf32>
      %176 = vector.extract %175[0, 0, 0] : f32 from vector<1x1x1xf32>
      %177 = arith.addf %168, %176 : f32
      %c6_i32 = arith.constant 6 : i32
      %178 = vector.broadcast %c6_i32 : i32 to vector<8x128xi32>
      %179 = arith.cmpi eq, %118, %178 : vector<8x128xi32>
      %180 = vector.broadcast %177 : f32 to vector<8x128xf32>
      %181 = arith.select %179, %180, %143 : vector<8x128xi1>, vector<8x128xf32>
      %c0_57 = arith.constant 0 : index
      %c0_58 = arith.constant 0 : index
      %c0_59 = arith.constant 0 : index
      %c0_60 = arith.constant 0 : index
      %182 = vector.load %arg8[%c0_57, %c0_58, %c0_59, %c0_60] : memref<1x1x8x128xf32, #tpu.memory_space<vmem>>, vector<1x1x8x128xf32>
      %183 = vector.shape_cast %182 : vector<1x1x8x128xf32> to vector<8x128xf32>
      %184 = vector.shape_cast %181 : vector<8x128xf32> to vector<1x1x8x128xf32>
      tpu.vector_store %arg8[%c0_57, %c0_58, %c0_59, %c0_60], %184 {strides = array<i32>} : memref<1x1x8x128xf32, #tpu.memory_space<vmem>>, vector<1x1x8x128xf32>,
    } else {
    }
    %true = arith.constant true
    %147 = arith.xori %144, %true : i1
    %148 = arith.extui %147 : i1 to i32
    %c0_i32_40 = arith.constant 0 : i32
    %149 = arith.cmpi ne, %148, %c0_i32_40 : i32
    scf.if %149 {
      %c0_41 = arith.constant 0 : index
      %c0_42 = arith.constant 0 : index
      %c0_43 = arith.constant 0 : index
      %c0_44 = arith.constant 0 : index
      %150 = vector.load %arg8[%c0_41, %c0_42, %c0_43, %c0_44] : memref<1x1x8x128xf32, #tpu.memory_space<vmem>>, vector<1x1x8x128xf32>
      %151 = vector.shape_cast %150 : vector<1x1x8x128xf32> to vector<8x128xf32>
      %152 = vector.shape_cast %143 : vector<8x128xf32> to vector<1x1x8x128xf32>
      tpu.vector_store %arg8[%c0_41, %c0_42, %c0_43, %c0_44], %152 {strides = array<i32>} : memref<1x1x8x128xf32, #tpu.memory_space<vmem>>, vector<1x1x8x128xf32>,
    } else {
    }
    return
  }
  func.func @transform_0(%arg0: i32, %arg1: i32) -> (i32, i32, i32, i32) {
    %c0_i32 = arith.constant 0 : i32
    %c0_i32_0 = arith.constant 0 : i32
    %c0_i32_1 = arith.constant 0 : i32
    return %arg0, %c0_i32, %arg1, %c0_i32_0 : i32, i32, i32, i32
  }
  func.func @transform_1(%arg0: i32, %arg1: i32) -> (i32, i32, i32, i32) {
    %c0_i32 = arith.constant 0 : i32
    %c0_i32_0 = arith.constant 0 : i32
    %c0_i32_1 = arith.constant 0 : i32
    return %arg0, %c0_i32, %arg1, %c0_i32_0 : i32, i32, i32, i32
  }
  func.func @transform_2(%arg0: i32, %arg1: i32) -> (i32, i32, i32, i32) {
    %c0_i32 = arith.constant 0 : i32
    %c0_i32_0 = arith.constant 0 : i32
    %c0_i32_1 = arith.constant 0 : i32
    return %arg0, %c0_i32, %arg1, %c0_i32_0 : i32, i32, i32, i32
  }
  func.func @transform_3(%arg0: i32, %arg1: i32) -> (i32, i32, i32, i32) {
    %c0_i32 = arith.constant 0 : i32
    %c0_i32_0 = arith.constant 0 : i32
    %c0_i32_1 = arith.constant 0 : i32
    %c0_i32_2 = arith.constant 0 : i32
    return %arg0, %c0_i32, %c0_i32_0, %c0_i32_1 : i32, i32, i32, i32
  }
  func.func @transform_4(%arg0: i32, %arg1: i32) -> (i32, i32) {
    %c0_i32 = arith.constant 0 : i32
    %c0_i32_0 = arith.constant 0 : i32
    %c0_i32_1 = arith.constant 0 : i32
    return %c0_i32, %c0_i32_0 : i32, i32
  }
  func.func @transform_5(%arg0: i32, %arg1: i32) -> (i32, i32) {
    %c0_i32 = arith.constant 0 : i32
    %c0_i32_0 = arith.constant 0 : i32
    %c0_i32_1 = arith.constant 0 : i32
    return %c0_i32, %c0_i32_0 : i32, i32
  }
  func.func @transform_6(%arg0: i32, %arg1: i32) -> (i32, i32, i32, i32) {
    %c0_i32 = arith.constant 0 : i32
    %c0_i32_0 = arith.constant 0 : i32
    %c0_i32_1 = arith.constant 0 : i32
    return %arg0, %arg1, %c0_i32, %c0_i32_0 : i32, i32, i32, i32
  }
}

</mosaic_0001>

<llo_original>
// kernel: flow_loss.1
$region0: #{flow_loss.1}
  #allocation0 [shape = 'u32[]', space=smem, size = 0x4, offset = 0x4, fixed_abs, tag = 'smem constant byte address 0x4 - core index']
  #allocation1 [shape = 'u32[144,128]{1,0:T(1,128)}', space=vmem, size = 0x12000, scoped, tag = 'internal scratch']
  #allocation2 [shape = 'f32[16,4]{1,0:T(8,128)}', space=vmem, size = 0x2000, scoped, tag = 'scratch operand']
  #allocation3 [shape = 'f32[16,4]{1,0:T(8,128)}', space=vmem, size = 0x2000, scoped, tag = 'scratch operand']
  #allocation4 [shape = 'f32[8,16]{1,0:T(8,128)}', space=vmem, size = 0x1000, scoped, tag = 'scratch operand']
  %s0 = inlined_call_operand.vmem [shape: f32[2,2,16,16], index: 0, kind: input, shape index: {}]
  %s1 = inlined_call_operand.vmem [shape: f32[2,2,16,16], index: 1, kind: input, shape index: {}]
  %s2 = inlined_call_operand.vmem [shape: f32[2,1,16,16], index: 2, kind: input, shape index: {}]
  %s3 = inlined_call_operand.vmem [shape: f32[2,2,4,4], index: 3, kind: input, shape index: {}]
  %s4 = inlined_call_operand.vmem [shape: f32[4,16], index: 4, kind: input, shape index: {}]
  %s5 = inlined_call_operand.vmem [shape: f32[16,4], index: 5, kind: input, shape index: {}]
  %s6 = inlined_call_operand.vmem [shape: f32[2,2,8,128], index: 6, kind: output, shape index: {}]
  %s7 = sld [smem:[#allocation0]]
  $region145: #{flow_loss.1} parent=0
    _
  %s9 = ssub.s32 1, %s7
  %s10 = scalar_select 0, %s9, %s7
  $region1: #{flow_loss.1} parent=0
    #allocation5 [shape = 'u8[16384]{0}', space=vmem, size = 0x4000, scoped, tag = 'input window, operand 0']
    #allocation6 [shape = 'u8[16384]{0}', space=vmem, size = 0x4000, scoped, tag = 'input window, operand 1']
    loop: start=0, step=1, limit=6
    $region2: #{flow_loss.1} parent=1 // loop_pre_header
      _
    $region3: #{flow_loss.1} parent=1 // loop_header
      %s12 = sphi 0, %s16
      %p13 = scmp.ge.s32.totalorder %s12, 6
      %s19 = sphi 0, %s31
      %s20 = sphi 0, %s27
      %s21 = sphi 0, %s19
      %s22 = sphi 0, %s20
      %s23 = sphi 0, %s21
      %s24 = sphi 0, %s22
      %s36 = sphi 0, %s38
      %s39 = sphi 0, %s36
      %s40 = sphi 0, %s39
      %s56 = sphi 0, %s40
      %s64 = sphi 0, %s66
      %s67 = sphi 0, %s64
      %s68 = sphi 0, %s67
      %s84 = sphi 0, %s68
      %s92 = sphi 0, %s94
      %s95 = sphi 0, %s92
      %s96 = sphi 0, %s95
      %s112 = sphi 0, %s96
      %s118 = sphi 0, %s120
      %s121 = sphi 0, %s118
      %s122 = sphi 0, %s121
      %s138 = sphi 0, %s122
      %s142 = sphi 0, %s142
      %s144 = sphi 0, %s142
      %s145 = sphi 0, %s144
      %s159 = sphi 0, %s145
      %s163 = sphi 0, %s163
      %s165 = sphi 0, %s163
      %s166 = sphi 0, %s165
      %s180 = sphi 0, %s166
      %s188 = sphi 0, %s190
      %s191 = sphi 0, %s188
      %s192 = sphi 0, %s191
      %s208 = sphi 0, %s192
    $region4: #{flow_loss.1} parent=1 // loop_header_branch
      %15 = sbr.rel (%p13) target = $region8
    $region5: #{flow_loss.1} parent=1 // loop_body
      %s17 = ssub.s32 %s12, 1
      %s18 = ssub.s32 %s12, 2
      %s25 = sadd.s32 1, %s20
      %p26 = scmp.ge.s32.totalorder %s25, 2
      %s27 = scalar_select %p26, 0, %s25
      %s28 = sadd.s32 1, %s19
      %s29 = scalar_select %p26, %s28, %s19
      %p30 = scmp.ge.s32.totalorder %s29, 2
      %s31 = scalar_select %p30, 0, %s29
      %s32 = ssub.s32 %s19, %s31
      %s33 = ssub.s32 %s20, %s27
      %s34 = sor.u32 %s32, %s33
      %p35 = scmp.eq.s32.totalorder %s34, 0
      %s37 = sadd.s32 %s36, 1
      %s38 = scalar_select %p35, %s36, %s37
      %p41 = pneg %p35
      %p42 = scmp.eq.s32.totalorder %s12, 3
      %p43 = por %p41, %p42
      %p44 = scmp.ne.s32.totalorder %s36, %s39
      %p45 = scmp.eq.s32.totalorder %s12, 0
      %p46 = por %p44, %p45
      %p47 = scmp.ne.s32.totalorder %s36, %s39
      %p48 = scmp.eq.s32.totalorder %s17, 3
      %p49 = por %p47, %p48
      %p50 = scmp.ne.s32.totalorder %s39, %s40
      %p51 = scmp.eq.s32.totalorder %s17, 0
      %p52 = por %p50, %p51
      %p53 = scmp.ne.s32.totalorder %s39, %s40
      %p54 = scmp.eq.s32.totalorder %s18, 3
      %p55 = por %p53, %p54
      %p57 = scmp.ne.s32.totalorder %s40, %s56
      %p58 = scmp.eq.s32.totalorder %s18, 0
      %p59 = por %p57, %p58
      %s60 = ssub.s32 %s19, %s31
      %s61 = ssub.s32 %s20, %s27
      %s62 = sor.u32 %s60, %s61
      %p63 = scmp.eq.s32.totalorder %s62, 0
      %s65 = sadd.s32 %s64, 1
      %s66 = scalar_select %p63, %s64, %s65
      %p69 = pneg %p63
      %p70 = scmp.eq.s32.totalorder %s12, 3
      %p71 = por %p69, %p70
      %p72 = scmp.ne.s32.totalorder %s64, %s67
      %p73 = scmp.eq.s32.totalorder %s12, 0
      %p74 = por %p72, %p73
      %p75 = scmp.ne.s32.totalorder %s64, %s67
      %p76 = scmp.eq.s32.totalorder %s17, 3
      %p77 = por %p75, %p76
      %p78 = scmp.ne.s32.totalorder %s67, %s68
      %p79 = scmp.eq.s32.totalorder %s17, 0
      %p80 = por %p78, %p79
      %p81 = scmp.ne.s32.totalorder %s67, %s68
      %p82 = scmp.eq.s32.totalorder %s18, 3
      %p83 = por %p81, %p82
      %p85 = scmp.ne.s32.totalorder %s68, %s84
      %p86 = scmp.eq.s32.totalorder %s18, 0
      %p87 = por %p85, %p86
      %s88 = ssub.s32 %s19, %s31
      %s89 = ssub.s32 %s20, %s27
      %s90 = sor.u32 %s88, %s89
      %p91 = scmp.eq.s32.totalorder %s90, 0
      %s93 = sadd.s32 %s92, 1
      %s94 = scalar_select %p91, %s92, %s93
      %p97 = pneg %p91
      %p98 = scmp.eq.s32.totalorder %s12, 3
      %p99 = por %p97, %p98
      %p100 = scmp.ne.s32.totalorder %s92, %s95
      %p101 = scmp.eq.s32.totalorder %s12, 0
      %p102 = por %p100, %p101
      %p103 = scmp.ne.s32.totalorder %s92, %s95
      %p104 = scmp.eq.s32.totalorder %s17, 3
      %p105 = por %p103, %p104
      %p106 = scmp.ne.s32.totalorder %s95, %s96
      %p107 = scmp.eq.s32.totalorder %s17, 0
      %p108 = por %p106, %p107
      %p109 = scmp.ne.s32.totalorder %s95, %s96
      %p110 = scmp.eq.s32.totalorder %s18, 3
      %p111 = por %p109, %p110
      %p113 = scmp.ne.s32.totalorder %s96, %s112
      %p114 = scmp.eq.s32.totalorder %s18, 0
      %p115 = por %p113, %p114
      %s116 = ssub.s32 %s19, %s31
      %p117 = scmp.eq.s32.totalorder %s116, 0
      %s119 = sadd.s32 %s118, 1
      %s120 = scalar_select %p117, %s118, %s119
      %p123 = pneg %p117
      %p124 = scmp.eq.s32.totalorder %s12, 3
      %p125 = por %p123, %p124
      %p126 = scmp.ne.s32.totalorder %s118, %s121
      %p127 = scmp.eq.s32.totalorder %s12, 0
      %p128 = por %p126, %p127
      %p129 = scmp.ne.s32.totalorder %s118, %s121
      %p130 = scmp.eq.s32.totalorder %s17, 3
      %p131 = por %p129, %p130
      %p132 = scmp.ne.s32.totalorder %s121, %s122
      %p133 = scmp.eq.s32.totalorder %s17, 0
      %p134 = por %p132, %p133
      %p135 = scmp.ne.s32.totalorder %s121, %s122
      %p136 = scmp.eq.s32.totalorder %s18, 3
      %p137 = por %p135, %p136
      %p139 = scmp.ne.s32.totalorder %s122, %s138
      %p140 = scmp.eq.s32.totalorder %s18, 0
      %p141 = por %p139, %p140
      %s143 = sadd.s32 %s142, 1
      %p146 = scmp.eq.s32.totalorder %s12, 3
      %p147 = scmp.ne.s32.totalorder %s142, %s144
      %p148 = scmp.eq.s32.totalorder %s12, 0
      %p149 = por %p147, %p148
      %p150 = scmp.ne.s32.totalorder %s142, %s144
      %p151 = scmp.eq.s32.totalorder %s17, 3
      %p152 = por %p150, %p151
      %p153 = scmp.ne.s32.totalorder %s144, %s145
      %p154 = scmp.eq.s32.totalorder %s17, 0
      %p155 = por %p153, %p154
      %p156 = scmp.ne.s32.totalorder %s144, %s145
      %p157 = scmp.eq.s32.totalorder %s18, 3
      %p158 = por %p156, %p157
      %p160 = scmp.ne.s32.totalorder %s145, %s159
      %p161 = scmp.eq.s32.totalorder %s18, 0
      %p162 = por %p160, %p161
      %s164 = sadd.s32 %s163, 1
      %p167 = scmp.eq.s32.totalorder %s12, 3
      %p168 = scmp.ne.s32.totalorder %s163, %s165
      %p169 = scmp.eq.s32.totalorder %s12, 0
      %p170 = por %p168, %p169
      %p171 = scmp.ne.s32.totalorder %s163, %s165
      %p172 = scmp.eq.s32.totalorder %s17, 3
      %p173 = por %p171, %p172
      %p174 = scmp.ne.s32.totalorder %s165, %s166
      %p175 = scmp.eq.s32.totalorder %s17, 0
      %p176 = por %p174, %p175
      %p177 = scmp.ne.s32.totalorder %s165, %s166
      %p178 = scmp.eq.s32.totalorder %s18, 3
      %p179 = por %p177, %p178
      %p181 = scmp.ne.s32.totalorder %s166, %s180
      %p182 = scmp.eq.s32.totalorder %s18, 0
      %p183 = por %p181, %p182
      %s184 = ssub.s32 %s19, %s31
      %s185 = ssub.s32 %s20, %s27
      %s186 = sor.u32 %s184, %s185
      %p187 = scmp.eq.s32.totalorder %s186, 0
      %s189 = sadd.s32 %s188, 1
      %s190 = scalar_select %p187, %s188, %s189
      %p193 = pneg %p187
      %p194 = scmp.eq.s32.totalorder %s12, 3
      %p195 = por %p193, %p194
      %p196 = scmp.ne.s32.totalorder %s188, %s191
      %p197 = scmp.eq.s32.totalorder %s12, 0
      %p198 = por %p196, %p197
      %p199 = scmp.ne.s32.totalorder %s188, %s191
      %p200 = scmp.eq.s32.totalorder %s17, 3
      %p201 = por %p199, %p200
      %p202 = scmp.ne.s32.totalorder %s191, %s192
      %p203 = scmp.eq.s32.totalorder %s17, 0
      %p204 = por %p202, %p203
      %p205 = scmp.ne.s32.totalorder %s191, %s192
      %p206 = scmp.eq.s32.totalorder %s18, 3
      %p207 = por %p205, %p206
      %p209 = scmp.ne.s32.totalorder %s192, %s208
      %p210 = scmp.eq.s32.totalorder %s18, 0
      %p211 = por %p209, %p210
      %p212 = scmp.le.s32.totalorder 1, %s12
      %p213 = scmp.lt.s32.totalorder %s12, 5
      %p214 = pnand %p212, %p213
      %p215 = pneg %p214
      // Predicated region
      $region9: #{flow_loss.1} parent=5 // pred_check
        _
      $region10: #{flow_loss.1} parent=5 // pred_check_branch
        %217 = sbr.rel (%p214) target = $region12
      $region11: #{flow_loss.1} parent=5 // pred_region
        %s218 = ssub.s32 %s12, 1
        // Predicated region
        $region13: #{flow_loss.1} parent=11 // pred_check
          %p219 = pneg %p155
        $region14: #{flow_loss.1} parent=11 // pred_check_branch
          %221 = sbr.rel (%p219) target = $region16
        $region15: #{flow_loss.1} parent=11 // pred_region
          _
        $region16: #{flow_loss.1} parent=11 // pred_fallthru
          _
        // Predicated region
        $region17: #{flow_loss.1} parent=11 // pred_check
          %p222 = pneg %p176
        $region18: #{flow_loss.1} parent=11 // pred_check_branch
          %224 = sbr.rel (%p222) target = $region20
        $region19: #{flow_loss.1} parent=11 // pred_region
          _
        $region20: #{flow_loss.1} parent=11 // pred_fallthru
          _
      $region12: #{flow_loss.1} parent=5 // pred_fallthru
        _
      %p225 = scmp.lt.s32.totalorder %s12, 4
      // Predicated region
      $region21: #{flow_loss.1} parent=5 // pred_check
        %p226 = pneg %p225
      $region22: #{flow_loss.1} parent=5 // pred_check_branch
        %228 = sbr.rel (%p226) target = $region24
      $region23: #{flow_loss.1} parent=5 // pred_region
        // Predicated region
        $region25: #{flow_loss.1} parent=23 // pred_check
          %p229 = pneg %p46
        $region26: #{flow_loss.1} parent=23 // pred_check_branch
          %231 = sbr.rel (%p229) target = $region28
        $region27: #{flow_loss.1} parent=23 // pred_region
          %s232 = sand.u32 %s36, 1
          %s233 = sand.u32 %s36, 1
          %s234 = smul.addr %s233, 16
          %s235 = scalar_lea.vmem [#allocation5], %s234
          %s236 = smul.addr %s19, 4
          %s237 = sadd.s32 %s20, %s236
          %s238 = smul.addr %s237, 8
          %s239 = scalar_lea.vmem %s0, %s238
          // Predicated region
          $region29: #{flow_loss.1} parent=27 // pred_check
            _
          $region30: #{flow_loss.1} parent=27 // pred_check_branch
            %241 = sbr.rel (0) target = $region32
          $region31: #{flow_loss.1} parent=27 // pred_region
            // Predicated region
            $region33: #{flow_loss.1} parent=31 // pred_check
              _
            $region34: #{flow_loss.1} parent=31 // pred_check_branch
              %243 = sbr.rel (0) target = $region36
            $region35: #{flow_loss.1} parent=31 // pred_region
              // Predicated region
              $region48: #{flow_loss.1} parent=35 // pred_check
                _
              $region49: #{flow_loss.1} parent=35 // pred_check_branch
                %260 = sbr.rel (0) target = $region51
              $region50: #{flow_loss.1} parent=35 // pred_region
                loop: start=0, step=1, limit=1
                $region52: #{flow_loss.1} parent=50 // loop_pre_header
                  _
                $region53: #{flow_loss.1} parent=50 // loop_header
                  %s262 = sphi 0, %s266
                  %p263 = scmp.ge.s32.totalorder %s262, 1
                  %s267 = sphi %s239, %s239
                  %s268 = sphi %s235, %s235
                $region54: #{flow_loss.1} parent=50 // loop_header_branch
                  %265 = sbr.rel (%p263) target = $region58
                $region55: #{flow_loss.1} parent=50 // loop_body
                  %v269 = vld [vmem:[%s267] sm:$0xff]
                  %270 = vst [vmem:[%s268] sm:$0xff] %v269
                  %v271 = vld [vmem:[%s267 + $0x10] sm:$0xff]
                  %272 = vst [vmem:[%s268 + $0x8] sm:$0xff] %v271
                $region56: #{flow_loss.1} parent=50 // loop_footer
                  %s266 = sadd.s32 1, %s262
                $region57: #{flow_loss.1} parent=50 // loop_footer_branch
                  %261 = sbr.rel target = $region53
                $region58: #{flow_loss.1} parent=50 // loop_exit
                  _
              $region51: #{flow_loss.1} parent=35 // pred_fallthru
                _
              // Predicated region
              $region59: #{flow_loss.1} parent=35 // pred_check
                _
              $region60: #{flow_loss.1} parent=35 // pred_check_branch
                %274 = sbr.rel target = $region62
              $region61: #{flow_loss.1} parent=35 // pred_region
                _
              $region62: #{flow_loss.1} parent=35 // pred_fallthru
                _
            $region36: #{flow_loss.1} parent=31 // pred_fallthru
              _
            // Predicated region
            $region37: #{flow_loss.1} parent=31 // pred_check
              _
            $region38: #{flow_loss.1} parent=31 // pred_check_branch
              %245 = sbr.rel target = $region40
            $region39: #{flow_loss.1} parent=31 // pred_region
              loop: start=0, step=1, limit=1
              $region41: #{flow_loss.1} parent=39 // loop_pre_header
                _
              $region42: #{flow_loss.1} parent=39 // loop_header
                %s248 = sphi 0, %s252
                %p249 = scmp.ge.s32.totalorder %s248, 1
                %s253 = sphi %s239, %s239
                %s254 = sphi %s235, %s235
              $region43: #{flow_loss.1} parent=39 // loop_header_branch
                %251 = sbr.rel (%p249) target = $region47
              $region44: #{flow_loss.1} parent=39 // loop_body
                %v255 = vld [vmem:[%s253] sm:$0xff]
                %256 = vst [vmem:[%s254] sm:$0xff] %v255
                %v257 = vld [vmem:[%s253 + $0x10] sm:$0xff]
                %258 = vst [vmem:[%s254 + $0x8] sm:$0xff] %v257
              $region45: #{flow_loss.1} parent=39 // loop_footer
                %s252 = sadd.s32 1, %s248
              $region46: #{flow_loss.1} parent=39 // loop_footer_branch
                %247 = sbr.rel target = $region42
              $region47: #{flow_loss.1} parent=39 // loop_exit
                _
            $region40: #{flow_loss.1} parent=31 // pred_fallthru
              _
          $region32: #{flow_loss.1} parent=27 // pred_fallthru
            _
          %275 = vnop
        $region28: #{flow_loss.1} parent=23 // pred_fallthru
          _
        // Predicated region
        $region63: #{flow_loss.1} parent=23 // pred_check
          %p276 = pneg %p74
        $region64: #{flow_loss.1} parent=23 // pred_check_branch
          %278 = sbr.rel (%p276) target = $region66
        $region65: #{flow_loss.1} parent=23 // pred_region
          %s279 = sand.u32 %s64, 1
          %s280 = sand.u32 %s64, 1
          %s281 = smul.addr %s280, 16
          %s282 = scalar_lea.vmem [#allocation6], %s281
          %s283 = smul.addr %s19, 4
          %s284 = sadd.s32 %s20, %s283
          %s285 = smul.addr %s284, 8
          %s286 = scalar_lea.vmem %s1, %s285
          // Predicated region
          $region67: #{flow_loss.1} parent=65 // pred_check
            _
          $region68: #{flow_loss.1} parent=65 // pred_check_branch
            %288 = sbr.rel (0) target = $region70
          $region69: #{flow_loss.1} parent=65 // pred_region
            // Predicated region
            $region71: #{flow_loss.1} parent=69 // pred_check
              _
            $region72: #{flow_loss.1} parent=69 // pred_check_branch
              %290 = sbr.rel (0) target = $region74
            $region73: #{flow_loss.1} parent=69 // pred_region
              // Predicated region
              $region86: #{flow_loss.1} parent=73 // pred_check
                _
              $region87: #{flow_loss.1} parent=73 // pred_check_branch
                %307 = sbr.rel (0) target = $region89
              $region88: #{flow_loss.1} parent=73 // pred_region
                loop: start=0, step=1, limit=1
                $region90: #{flow_loss.1} parent=88 // loop_pre_header
                  _
                $region91: #{flow_loss.1} parent=88 // loop_header
                  %s309 = sphi 0, %s313
                  %p310 = scmp.ge.s32.totalorder %s309, 1
                  %s314 = sphi %s286, %s286
                  %s315 = sphi %s282, %s282
                $region92: #{flow_loss.1} parent=88 // loop_header_branch
                  %312 = sbr.rel (%p310) target = $region96
                $region93: #{flow_loss.1} parent=88 // loop_body
                  %v316 = vld [vmem:[%s314] sm:$0xff]
                  %317 = vst [vmem:[%s315] sm:$0xff] %v316
                  %v318 = vld [vmem:[%s314 + $0x10] sm:$0xff]
                  %319 = vst [vmem:[%s315 + $0x8] sm:$0xff] %v318
                $region94: #{flow_loss.1} parent=88 // loop_footer
                  %s313 = sadd.s32 1, %s309
                $region95: #{flow_loss.1} parent=88 // loop_footer_branch
                  %308 = sbr.rel target = $region91
                $region96: #{flow_loss.1} parent=88 // loop_exit
                  _
              $region89: #{flow_loss.1} parent=73 // pred_fallthru
                _
              // Predicated region
              $region97: #{flow_loss.1} parent=73 // pred_check
                _
              $region98: #{flow_loss.1} parent=73 // pred_check_branch
                %321 = sbr.rel target = $region100
              $region99: #{flow_loss.1} parent=73 // pred_region
                _
              $region100: #{flow_loss.1} parent=73 // pred_fallthru
                _
            $region74: #{flow_loss.1} parent=69 // pred_fallthru
              _
            // Predicated region
            $region75: #{flow_loss.1} parent=69 // pred_check
              _
            $region76: #{flow_loss.1} parent=69 // pred_check_branch
              %292 = sbr.rel target = $region78
            $region77: #{flow_loss.1} parent=69 // pred_region
              loop: start=0, step=1, limit=1
              $region79: #{flow_loss.1} parent=77 // loop_pre_header
                _
              $region80: #{flow_loss.1} parent=77 // loop_header
                %s295 = sphi 0, %s299
                %p296 = scmp.ge.s32.totalorder %s295, 1
                %s300 = sphi %s286, %s286
                %s301 = sphi %s282, %s282
              $region81: #{flow_loss.1} parent=77 // loop_header_branch
                %298 = sbr.rel (%p296) target = $region85
              $region82: #{flow_loss.1} parent=77 // loop_body
                %v302 = vld [vmem:[%s300] sm:$0xff]
                %303 = vst [vmem:[%s301] sm:$0xff] %v302
                %v304 = vld [vmem:[%s300 + $0x10] sm:$0xff]
                %305 = vst [vmem:[%s301 + $0x8] sm:$0xff] %v304
              $region83: #{flow_loss.1} parent=77 // loop_footer
                %s299 = sadd.s32 1, %s295
              $region84: #{flow_loss.1} parent=77 // loop_footer_branch
                %294 = sbr.rel target = $region80
              $region85: #{flow_loss.1} parent=77 // loop_exit
                _
            $region78: #{flow_loss.1} parent=69 // pred_fallthru
              _
          $region70: #{flow_loss.1} parent=65 // pred_fallthru
            _
          %322 = vnop
        $region66: #{flow_loss.1} parent=23 // pred_fallthru
          _
        // Predicated region
        $region101: #{flow_loss.1} parent=23 // pred_check
          %p323 = pneg %p102
        $region102: #{flow_loss.1} parent=23 // pred_check_branch
          %325 = sbr.rel (%p323) target = $region104
        $region103: #{flow_loss.1} parent=23 // pred_region
          %p326 = scmp.lt.s32.totalorder %s19, 1
          %s327 = scalar_select %p326, %s19, 1
          %p328 = scmp.lt.s32.totalorder %s20, 1
          %s329 = scalar_select %p328, %s20, 1
          %s330 = smul.addr %s327, 2
          %s331 = sadd.s32 %s329, %s330
          %s332 = smul.addr %s331, 8
          %s333 = scalar_lea.vmem %s2, %s332
        $region104: #{flow_loss.1} parent=23 // pred_fallthru
          _
        // Predicated region
        $region105: #{flow_loss.1} parent=23 // pred_check
          %p334 = pneg %p128
        $region106: #{flow_loss.1} parent=23 // pred_check_branch
          %336 = sbr.rel (%p334) target = $region108
        $region107: #{flow_loss.1} parent=23 // pred_region
          %p337 = scmp.lt.s32.totalorder %s19, 1
          %s338 = scalar_select %p337, %s19, 1
          %s339 = smul.addr %s338, 2
          %s340 = smul.addr %s339, 4
          %s341 = scalar_lea.vmem %s3, %s340
        $region108: #{flow_loss.1} parent=23 // pred_fallthru
          _
      $region24: #{flow_loss.1} parent=5 // pred_fallthru
        _
      %p342 = scmp.le.s32.totalorder 1, %s12
      %p343 = scmp.lt.s32.totalorder %s12, 5
      %p344 = pnand %p342, %p343
      %p345 = pneg %p344
      // Predicated region
      $region109: #{flow_loss.1} parent=5 // pred_check
        _
      $region110: #{flow_loss.1} parent=5 // pred_check_branch
        %347 = sbr.rel (%p344) target = $region112
      $region111: #{flow_loss.1} parent=5 // pred_region
        %s348 = ssub.s32 %s12, 1
        %s349 = sand.u32 %s39, 1
        %s350 = sand.u32 %s39, 1
        %s351 = smul.addr %s350, 16
        %s352 = scalar_lea.vmem [#allocation5], %s351
        // Predicated region
        $region113: #{flow_loss.1} parent=111 // pred_check
          %p353 = pneg %p52
        $region114: #{flow_loss.1} parent=111 // pred_check_branch
          %355 = sbr.rel (%p353) target = $region116
        $region115: #{flow_loss.1} parent=111 // pred_region
          _
        $region116: #{flow_loss.1} parent=111 // pred_fallthru
          _
        %s356 = sand.u32 %s67, 1
        %s357 = sand.u32 %s67, 1
        %s358 = smul.addr %s357, 16
        %s359 = scalar_lea.vmem [#allocation6], %s358
        // Predicated region
        $region117: #{flow_loss.1} parent=111 // pred_check
          %p360 = pneg %p80
        $region118: #{flow_loss.1} parent=111 // pred_check_branch
          %362 = sbr.rel (%p360) target = $region120
        $region119: #{flow_loss.1} parent=111 // pred_region
          _
        $region120: #{flow_loss.1} parent=111 // pred_fallthru
          _
        %s363 = sand.u32 %s39, 1
        %s364 = sand.u32 %s39, 1
        %s365 = smul.addr %s364, 16
        %s366 = scalar_lea.vmem [#allocation5], %s365
        %p367 = pneg %p52
        %p368 = pneg %p49
        %s369 = sand.u32 %s67, 1
        %s370 = sand.u32 %s67, 1
        %s371 = smul.addr %s370, 16
        %s372 = scalar_lea.vmem [#allocation6], %s371
        %p373 = pneg %p80
        %p374 = pneg %p77
        %p375 = scmp.lt.s32.totalorder %s21, 1
        %s376 = scalar_select %p375, %s21, 1
        %p377 = scmp.lt.s32.totalorder %s22, 1
        %s378 = scalar_select %p377, %s22, 1
        %s379 = smul.addr %s376, 2
        %s380 = sadd.s32 %s378, %s379
        %s381 = smul.addr %s380, 8
        %s382 = scalar_lea.vmem %s2, %s381
        %p383 = pneg %p108
        %p384 = pneg %p105
        %p385 = scmp.lt.s32.totalorder %s21, 1
        %s386 = scalar_select %p385, %s21, 1
        %s387 = smul.addr %s386, 2
        %s388 = smul.addr %s387, 4
        %s389 = scalar_lea.vmem %s3, %s388
        %p390 = pneg %p134
        %p391 = pneg %p131
        %p392 = pneg %p155
        %p393 = pneg %p152
        %p394 = pneg %p176
        %p395 = pneg %p173
        %p396 = pneg %p204
        %p397 = pneg %p201
        %p398 = scmp.lt.s32.totalorder %s21, 1
        %s399 = scalar_select %p398, %s21, 1
        %p400 = scmp.lt.s32.totalorder %s22, 1
        %s401 = scalar_select %p400, %s22, 1
        %s402 = smul.addr %s399, 2
        %s403 = sadd.s32 %s401, %s402
        %s404 = smul.addr %s403, 8
        %s405 = scalar_lea.vmem %s6, %s404
        %p406 = scmp.lt.s32.totalorder %s21, 1
        %s407 = scalar_select %p406, %s21, 1
        %p408 = scmp.lt.s32.totalorder %s22, 1
        %s409 = scalar_select %p408, %s22, 1
        %s410 = smul.addr %s407, 2
        %s411 = sadd.s32 %s409, %s410
        %s412 = smul.addr %s411, 8
        %s413 = scalar_lea.vmem %s2, %s412
        %p414 = scmp.lt.s32.totalorder %s21, 1
        %s415 = scalar_select %p414, %s21, 1
        %s416 = smul.addr %s415, 2
        %s417 = smul.addr %s416, 4
        %s418 = scalar_lea.vmem %s3, %s417
        %p419 = scmp.lt.s32.totalorder %s21, 1
        %s420 = scalar_select %p419, %s21, 1
        %p421 = scmp.lt.s32.totalorder %s22, 1
        %s422 = scalar_select %p421, %s22, 1
        %s423 = smul.addr %s420, 2
        %s424 = sadd.s32 %s422, %s423
        %s425 = smul.addr %s424, 8
        %s426 = scalar_lea.vmem %s6, %s425
        %v427 = vld [vmem:[%s352] sm:$0xff]
        %v428 = vld [vmem:[%s352 + $0x8] sm:$0xff]
        %v429 = vld [vmem:[%s359] sm:$0xff]
        %v430 = vld [vmem:[%s359 + $0x8] sm:$0xff]
        %v431 = vld [vmem:[%s413] sm:$0xff]
        %p432 = scmp.eq.s32.totalorder %s22, 0
        // Predicated region
        $region121: #{flow_loss.1} parent=111 // pred_check
          %p433 = pneg %p432
        $region122: #{flow_loss.1} parent=111 // pred_check_branch
          %435 = sbr.rel (%p433) target = $region124
        $region123: #{flow_loss.1} parent=111 // pred_region
          %vm436 = vcmask 130048
          %437 = vst.msk [vmem:[#allocation4] sm:$0xff] %vm436, 0.0
        $region124: #{flow_loss.1} parent=111 // pred_fallthru
          _
        %v438 = vsub.f32 %v427, %v429
        %v439 = vsub.f32 %v428, %v430
        %v440 = vand.u32 2147483647, %v438
        %v441 = vand.u32 2147483647, %v439
        %v442 = vadd.f32 %v440, %v441
        %vm443 = vcmask 130048
        %v444 = vsel %vm443, %v442, 0.0
        %445 = vadd.xlane.f32.xlu0 %v444
        %v446 = vpop.xlane.xlu0 %445
        %v447 = vrot.slane %v446, 4
        %v448 = vadd.f32 %v446, %v447
        %v449 = vrot.slane %v448, 2
        %v450 = vadd.f32 %v448, %v449
        %v451 = vrot.slane %v450, 1
        %v452 = vadd.f32 %v450, %v451
        %s453 = vtos %v452
        %v454 = vmul.f32 %v438, %v438
        %v455 = vmul.f32 %v439, %v439
        %v456 = vadd.f32 %v454, %v455
        %v457 = vrsqrt.pop %v456
        %v458 = vmul.f32 %v456, %v457
        %vm459 = vcmp.eq.f32.partialorder %v456, inf
        %v460 = vsel %vm459, %v456, %v458
        %vm461 = vcmp.eq.f32.partialorder %v456, 0.0
        %v462 = vand.u32 %v456, 2147483648
        %v463 = vsel %vm461, %v462, %v460
        %v464 = vsel %vm443, %v463, 0.0
        %465 = vadd.xlane.f32.xlu0 %v464
        %v466 = vpop.xlane.xlu0 %465
        %v467 = vrot.slane %v466, 4
        %v468 = vadd.f32 %v466, %v467
        %v469 = vrot.slane %v468, 2
        %v470 = vadd.f32 %v468, %v469
        %v471 = vrot.slane %v470, 1
        %v472 = vadd.f32 %v470, %v471
        %s473 = vtos %v472
        %vm474 = vcmp.gt.f32.partialorder %v431, 0.5
        %v475 = vsel %vm474, 1, 0
        %v476 = vcvt.s32.f32 %v475
        %v477 = vmul.f32 %v442, %v476
        %v478 = vsel %vm443, %v477, 0.0
        %479 = vadd.xlane.f32.xlu0 %v478
        %v480 = vpop.xlane.xlu0 %479
        %v481 = vrot.slane %v480, 4
        %v482 = vadd.f32 %v480, %v481
        %v483 = vrot.slane %v482, 2
        %v484 = vadd.f32 %v482, %v483
        %v485 = vrot.slane %v484, 1
        %v486 = vadd.f32 %v484, %v485
        %s487 = vtos %v486
        %v488 = vsel %vm443, %v476, 0.0
        %489 = vadd.xlane.f32.xlu0 %v488
        %v490 = vpop.xlane.xlu0 %489
        %v491 = vrot.slane %v490, 4
        %v492 = vadd.f32 %v490, %v491
        %v493 = vrot.slane %v492, 2
        %v494 = vadd.f32 %v492, %v493
        %v495 = vrot.slane %v494, 1
        %v496 = vadd.f32 %v494, %v495
        %s497 = vtos %v496
        %v498 = vsub.f32 1.0, %v431
        %501 = vrot.lane.b32.xlu0 %v427, 127
        %v502 = vpop.permute.xlu0 %501
        %503 = vrot.lane.b32.xlu0 %v428, 127
        %v504 = vpop.permute.xlu0 %503
        %v507 = vsub.f32 %v427, %v502
        %v508 = vsub.f32 %v428, %v504
        %v509 = vand.u32 2147483647, %v507
        %v510 = vand.u32 2147483647, %v508
        %v511 = vadd.f32 %v509, %v510
        %v512 = vmul.f32 %v498, %v511
        %vm513 = vcmask 121856
        %v514 = vsel %vm513, %v512, 0.0
        %515 = vadd.xlane.f32.xlu0 %v514
        %v516 = vpop.xlane.xlu0 %515
        %v517 = vrot.slane %v516, 4
        %v518 = vadd.f32 %v516, %v517
        %v519 = vrot.slane %v518, 2
        %v520 = vadd.f32 %v518, %v519
        %v521 = vrot.slane %v520, 1
        %v522 = vadd.f32 %v520, %v521
        %s523 = vtos %v522
        %v524 = vrot.slane %v427, 1
        %v525 = vrot.slane %v428, 1
        %v528 = vsub.f32 %v427, %v524
        %v529 = vsub.f32 %v428, %v525
        %v530 = vand.u32 2147483647, %v528
        %v531 = vand.u32 2147483647, %v529
        %v532 = vadd.f32 %v530, %v531
        %v533 = vmul.f32 %v498, %v532
        %vm534 = vcmask 129024
        %v535 = vsel %vm534, %v533, 0.0
        %536 = vadd.xlane.f32.xlu0 %v535
        %v537 = vpop.xlane.xlu0 %536
        %v538 = vrot.slane %v537, 4
        %v539 = vadd.f32 %v537, %v538
        %v540 = vrot.slane %v539, 2
        %v541 = vadd.f32 %v539, %v540
        %v542 = vrot.slane %v541, 1
        %v543 = vadd.f32 %v541, %v542
        %s544 = vtos %v543
        %v545 = vld [vmem:[#allocation4 + $0x2] sm:$0x1]
        %v546 = vld [vmem:[#allocation4] sm:$0x1]
        %v547 = vsub.f32 %v546, %v427
        %v548 = vand.u32 2147483647, %v547
        %v549 = vld [vmem:[#allocation4 + $0x1] sm:$0x1]
        %v550 = vsub.f32 %v549, %v428
        %v551 = vand.u32 2147483647, %v550
        %v552 = vadd.f32 %v548, %v551
        %v553 = vmul.f32 %v545, %v552
        %vm554 = vcmask 122880
        %v555 = vsel %vm554, %v553, 0.0
        %556 = vadd.xlane.f32.xlu0 %v555
        %v557 = vpop.xlane.xlu0 %556
        %v558 = vrot.slane %v557, 4
        %v559 = vadd.f32 %v557, %v558
        %v560 = vrot.slane %v559, 2
        %v561 = vadd.f32 %v559, %v560
        %v562 = vrot.slane %v561, 1
        %v563 = vadd.f32 %v561, %v562
        %s564 = vtos %v563
        %s565 = sadd.f32 %s544, %s564
        %vm566 = vcmask 130055
        %567 = vst.msk [vmem:[#allocation4 - $0x7] sm:$0x80] %vm566, %v427
        %568 = vst.msk [vmem:[#allocation4 - $0x6] sm:$0x80] %vm566, %v428
        %569 = vst.msk [vmem:[#allocation4 - $0x5] sm:$0x80] %vm566, %v498
        %v570 = vld [vmem:[%s5] sm:$0xff]
        %v571 = vld [vmem:[%s5 + $0x8] sm:$0xff]
        %v573 = vsel %vm443, %v429, 0
        %575 = vmatprep.subr.mxu0 0.0
        %576 = vmatpush1.msra.mxu0 %v570
        %577 = vmatprep.subr.mxu0 0.0
        %578 = vmatpush1.msra.mxu0 %v571
        %579 = vmatprep.subr.mxu0 0.0
        %580 = vmatpush1.msra.mxu0 0.0
        %581 = vmatprep.subr.mxu0 0.0
        %582 = vmatpush1.msra.mxu0 0.0
        %583 = vmatprep.subr.mxu0 0.0
        %584 = vmatpush1.msra.mxu0 0.0
        %585 = vmatprep.subr.mxu0 0.0
        %586 = vmatpush1.msra.mxu0 0.0
        %587 = vmatprep.subr.mxu0 0.0
        %588 = vmatpush1.msra.mxu0 0.0
        %589 = vmatprep.subr.mxu0 0.0
        %590 = vmatpush1.msra.mxu0 0.0
        %591 = vmatprep.subr.mxu0 0.0
        %592 = vmatpush1.msra.mxu0 0.0
        %593 = vmatprep.subr.mxu0 0.0
        %594 = vmatpush1.msra.mxu0 0.0
        %595 = vmatprep.subr.mxu0 0.0
        %596 = vmatpush1.msra.mxu0 0.0
        %597 = vmatprep.subr.mxu0 0.0
        %598 = vmatpush1.msra.mxu0 0.0
        %599 = vmatprep.subr.mxu0 0.0
        %600 = vmatpush1.msra.mxu0 0.0
        %601 = vmatprep.subr.mxu0 0.0
        %602 = vmatpush1.msra.mxu0 0.0
        %603 = vmatprep.subr.mxu0 0.0
        %604 = vmatpush1.msra.mxu0 0.0
        %605 = vmatprep.subr.mxu0 0.0
        %606 = vmatpush1.msra.mxu0 0.0
        %607 = vmatprep.subr.mxu0 0.0
        %608 = vmatpush1.msra.mxu0 0.0
        %609 = vmatprep.subr.mxu0 0.0
        %610 = vmatpush1.msra.mxu0 0.0
        %611 = vmatprep.subr.mxu0 0.0
        %612 = vmatpush1.msra.mxu0 0.0
        %613 = vmatprep.subr.mxu0 0.0
        %614 = vmatpush1.msra.mxu0 0.0
        %615 = vmatprep.subr.mxu0 0.0
        %616 = vmatpush1.msra.mxu0 0.0
        %617 = vmatprep.subr.mxu0 0.0
        %618 = vmatpush1.msra.mxu0 0.0
        %619 = vmatprep.subr.mxu0 0.0
        %620 = vmatpush1.msra.mxu0 0.0
        %621 = vmatprep.subr.mxu0 0.0
        %622 = vmatpush1.msra.mxu0 0.0
        %623 = vmatprep.subr.mxu0 0.0
        %624 = vmatpush1.msra.mxu0 0.0
        %625 = vmatprep.subr.mxu0 0.0
        %626 = vmatpush1.msra.mxu0 0.0
        %627 = vmatprep.subr.mxu0 0.0
        %628 = vmatpush1.msra.mxu0 0.0
        %629 = vmatprep.subr.mxu0 0.0
        %630 = vmatpush1.msra.mxu0 0.0
        %631 = vmatprep.subr.mxu0 0.0
        %632 = vmatpush1.msra.mxu0 0.0
        %633 = vmatprep.subr.mxu0 0.0
        %634 = vmatpush1.msra.mxu0 0.0
        %635 = vmatprep.subr.mxu0 0.0
        %636 = vmatpush1.msra.mxu0 0.0
        %637 = vmatprep.subr.mxu0 0.0
        %638 = vmatpush1.msra.mxu0 0.0
        %639 = vmatprep.mubr.f32.mxu0 0.0
        %640 = vmatmul.mubr.f32.gmra.mrb[0].mxu0 %v573
        %v641 = vpop.f32.mrb[0].mxu0
        %v642 = vadd.f32 0.0, %v641
        %v643 = vpop.f32.mrb[0].mxu0
        %644 = vdwg.mxu0
        %v646 = vsel %vm443, %v430, 0
        %648 = vmatprep.subr.mxu0 0.0
        %649 = vmatpush1.msra.mxu0 %v570
        %650 = vmatprep.subr.mxu0 0.0
        %651 = vmatpush1.msra.mxu0 %v571
        %652 = vmatprep.subr.mxu0 0.0
        %653 = vmatpush1.msra.mxu0 0.0
        %654 = vmatprep.subr.mxu0 0.0
        %655 = vmatpush1.msra.mxu0 0.0
        %656 = vmatprep.subr.mxu0 0.0
        %657 = vmatpush1.msra.mxu0 0.0
        %658 = vmatprep.subr.mxu0 0.0
        %659 = vmatpush1.msra.mxu0 0.0
        %660 = vmatprep.subr.mxu0 0.0
        %661 = vmatpush1.msra.mxu0 0.0
        %662 = vmatprep.subr.mxu0 0.0
        %663 = vmatpush1.msra.mxu0 0.0
        %664 = vmatprep.subr.mxu0 0.0
        %665 = vmatpush1.msra.mxu0 0.0
        %666 = vmatprep.subr.mxu0 0.0
        %667 = vmatpush1.msra.mxu0 0.0
        %668 = vmatprep.subr.mxu0 0.0
        %669 = vmatpush1.msra.mxu0 0.0
        %670 = vmatprep.subr.mxu0 0.0
        %671 = vmatpush1.msra.mxu0 0.0
        %672 = vmatprep.subr.mxu0 0.0
        %673 = vmatpush1.msra.mxu0 0.0
        %674 = vmatprep.subr.mxu0 0.0
        %675 = vmatpush1.msra.mxu0 0.0
        %676 = vmatprep.subr.mxu0 0.0
        %677 = vmatpush1.msra.mxu0 0.0
        %678 = vmatprep.subr.mxu0 0.0
        %679 = vmatpush1.msra.mxu0 0.0
        %680 = vmatprep.subr.mxu0 0.0
        %681 = vmatpush1.msra.mxu0 0.0
        %682 = vmatprep.subr.mxu0 0.0
        %683 = vmatpush1.msra.mxu0 0.0
        %684 = vmatprep.subr.mxu0 0.0
        %685 = vmatpush1.msra.mxu0 0.0
        %686 = vmatprep.subr.mxu0 0.0
        %687 = vmatpush1.msra.mxu0 0.0
        %688 = vmatprep.subr.mxu0 0.0
        %689 = vmatpush1.msra.mxu0 0.0
        %690 = vmatprep.subr.mxu0 0.0
        %691 = vmatpush1.msra.mxu0 0.0
        %692 = vmatprep.subr.mxu0 0.0
        %693 = vmatpush1.msra.mxu0 0.0
        %694 = vmatprep.subr.mxu0 0.0
        %695 = vmatpush1.msra.mxu0 0.0
        %696 = vmatprep.subr.mxu0 0.0
        %697 = vmatpush1.msra.mxu0 0.0
        %698 = vmatprep.subr.mxu0 0.0
        %699 = vmatpush1.msra.mxu0 0.0
        %700 = vmatprep.subr.mxu0 0.0
        %701 = vmatpush1.msra.mxu0 0.0
        %702 = vmatprep.subr.mxu0 0.0
        %703 = vmatpush1.msra.mxu0 0.0
        %704 = vmatprep.subr.mxu0 0.0
        %705 = vmatpush1.msra.mxu0 0.0
        %706 = vmatprep.subr.mxu0 0.0
        %707 = vmatpush1.msra.mxu0 0.0
        %708 = vmatprep.subr.mxu0 0.0
        %709 = vmatpush1.msra.mxu0 0.0
        %710 = vmatprep.subr.mxu0 0.0
        %711 = vmatpush1.msra.mxu0 0.0
        %712 = vmatprep.mubr.f32.mxu0 0.0
        %713 = vmatmul.mubr.f32.gmra.mrb[0].mxu0 %v646
        %v714 = vpop.f32.mrb[0].mxu0
        %v715 = vadd.f32 0.0, %v714
        %v716 = vpop.f32.mrb[0].mxu0
        %717 = vdwg.mxu0
        %s718 = smul.u32 %s22, 8
        %s719 = scalar_lea.vmem [#allocation2], %s718
        %vm720 = vcmask 31744
        %721 = vst.msk [vmem:[%s719] sm:$0xff] %vm720, %v642
        %s722 = scalar_lea.vmem [#allocation3], %s718
        %723 = vst.msk [vmem:[%s722] sm:$0xff] %vm720, %v715
        %v724 = vlaneseq
        %v725 = vshrl.u32 %v724, 7
        %vm726 = vcmp.eq.s32.totalorder %v725, 0
        %v727 = vstv %s453
        %v728 = vsel %vm726, %v727, 0.0
        %vm729 = vcmp.eq.s32.totalorder %v725, 1
        %v730 = vstv %s473
        %v731 = vsel %vm729, %v730, %v728
        %vm732 = vcmp.eq.s32.totalorder %v725, 2
        %v733 = vstv %s523
        %v734 = vsel %vm732, %v733, %v731
        %vm735 = vcmp.eq.s32.totalorder %v725, 3
        %v736 = vstv %s565
        %v737 = vsel %vm735, %v736, %v734
        %vm738 = vcmp.eq.s32.totalorder %v725, 4
        %v739 = vstv %s487
        %v740 = vsel %vm738, %v739, %v737
        %vm741 = vcmp.eq.s32.totalorder %v725, 5
        %v742 = vstv %s497
        %v743 = vsel %vm741, %v742, %v740
        %p744 = scmp.eq.s32.totalorder %s22, 1
        // Predicated region
        $region125: #{flow_loss.1} parent=111 // pred_check
          %p745 = pneg %p744
        $region126: #{flow_loss.1} parent=111 // pred_check_branch
          %747 = sbr.rel (%p745) target = $region128
        $region127: #{flow_loss.1} parent=111 // pred_region
          %v748 = vld [vmem:[%s4] sm:$0xf]
          %v749 = vld [vmem:[%s418] sm:$0xf]
          %v750 = vld [vmem:[%s418 + $0x4] sm:$0xf]
          %v751 = vld [vmem:[#allocation2] sm:$0xff]
          %v752 = vld [vmem:[#allocation2 + $0x8] sm:$0xff]
          %v754 = vsel %vm443, %v748, 0
          %756 = vmatprep.subr.mxu0 0.0
          %757 = vmatpush1.msra.mxu0 %v751
          %758 = vmatprep.subr.mxu0 0.0
          %759 = vmatpush1.msra.mxu0 %v752
          %760 = vmatprep.subr.mxu0 0.0
          %761 = vmatpush1.msra.mxu0 0.0
          %762 = vmatprep.subr.mxu0 0.0
          %763 = vmatpush1.msra.mxu0 0.0
          %764 = vmatprep.subr.mxu0 0.0
          %765 = vmatpush1.msra.mxu0 0.0
          %766 = vmatprep.subr.mxu0 0.0
          %767 = vmatpush1.msra.mxu0 0.0
          %768 = vmatprep.subr.mxu0 0.0
          %769 = vmatpush1.msra.mxu0 0.0
          %770 = vmatprep.subr.mxu0 0.0
          %771 = vmatpush1.msra.mxu0 0.0
          %772 = vmatprep.subr.mxu0 0.0
          %773 = vmatpush1.msra.mxu0 0.0
          %774 = vmatprep.subr.mxu0 0.0
          %775 = vmatpush1.msra.mxu0 0.0
          %776 = vmatprep.subr.mxu0 0.0
          %777 = vmatpush1.msra.mxu0 0.0
          %778 = vmatprep.subr.mxu0 0.0
          %779 = vmatpush1.msra.mxu0 0.0
          %780 = vmatprep.subr.mxu0 0.0
          %781 = vmatpush1.msra.mxu0 0.0
          %782 = vmatprep.subr.mxu0 0.0
          %783 = vmatpush1.msra.mxu0 0.0
          %784 = vmatprep.subr.mxu0 0.0
          %785 = vmatpush1.msra.mxu0 0.0
          %786 = vmatprep.subr.mxu0 0.0
          %787 = vmatpush1.msra.mxu0 0.0
          %788 = vmatprep.subr.mxu0 0.0
          %789 = vmatpush1.msra.mxu0 0.0
          %790 = vmatprep.subr.mxu0 0.0
          %791 = vmatpush1.msra.mxu0 0.0
          %792 = vmatprep.subr.mxu0 0.0
          %793 = vmatpush1.msra.mxu0 0.0
          %794 = vmatprep.subr.mxu0 0.0
          %795 = vmatpush1.msra.mxu0 0.0
          %796 = vmatprep.subr.mxu0 0.0
          %797 = vmatpush1.msra.mxu0 0.0
          %798 = vmatprep.subr.mxu0 0.0
          %799 = vmatpush1.msra.mxu0 0.0
          %800 = vmatprep.subr.mxu0 0.0
          %801 = vmatpush1.msra.mxu0 0.0
          %802 = vmatprep.subr.mxu0 0.0
          %803 = vmatpush1.msra.mxu0 0.0
          %804 = vmatprep.subr.mxu0 0.0
          %805 = vmatpush1.msra.mxu0 0.0
          %806 = vmatprep.subr.mxu0 0.0
          %807 = vmatpush1.msra.mxu0 0.0
          %808 = vmatprep.subr.mxu0 0.0
          %809 = vmatpush1.msra.mxu0 0.0
          %810 = vmatprep.subr.mxu0 0.0
          %811 = vmatpush1.msra.mxu0 0.0
          %812 = vmatprep.subr.mxu0 0.0
          %813 = vmatpush1.msra.mxu0 0.0
          %814 = vmatprep.subr.mxu0 0.0
          %815 = vmatpush1.msra.mxu0 0.0
          %816 = vmatprep.subr.mxu0 0.0
          %817 = vmatpush1.msra.mxu0 0.0
          %818 = vmatprep.subr.mxu0 0.0
          %819 = vmatpush1.msra.mxu0 0.0
          %820 = vmatprep.mubr.f32.mxu0 0.0
          %821 = vmatmul.mubr.f32.gmra.mrb[0].mxu0 %v754
          %v822 = vpop.f32.mrb[0].mxu0
          %v823 = vadd.f32 0.0, %v822
          %v824 = vpop.f32.mrb[0].mxu0
          %825 = vdwg.mxu0
          %v826 = vmul.f32 %v823, 0.25
          %v827 = vld [vmem:[#allocation3] sm:$0xff]
          %v828 = vld [vmem:[#allocation3 + $0x8] sm:$0xff]
          %829 = vmatprep.subr.mxu0 0.0
          %830 = vmatpush1.msra.mxu0 %v827
          %831 = vmatprep.subr.mxu0 0.0
          %832 = vmatpush1.msra.mxu0 %v828
          %833 = vmatprep.subr.mxu0 0.0
          %834 = vmatpush1.msra.mxu0 0.0
          %835 = vmatprep.subr.mxu0 0.0
          %836 = vmatpush1.msra.mxu0 0.0
          %837 = vmatprep.subr.mxu0 0.0
          %838 = vmatpush1.msra.mxu0 0.0
          %839 = vmatprep.subr.mxu0 0.0
          %840 = vmatpush1.msra.mxu0 0.0
          %841 = vmatprep.subr.mxu0 0.0
          %842 = vmatpush1.msra.mxu0 0.0
          %843 = vmatprep.subr.mxu0 0.0
          %844 = vmatpush1.msra.mxu0 0.0
          %845 = vmatprep.subr.mxu0 0.0
          %846 = vmatpush1.msra.mxu0 0.0
          %847 = vmatprep.subr.mxu0 0.0
          %848 = vmatpush1.msra.mxu0 0.0
          %849 = vmatprep.subr.mxu0 0.0
          %850 = vmatpush1.msra.mxu0 0.0
          %851 = vmatprep.subr.mxu0 0.0
          %852 = vmatpush1.msra.mxu0 0.0
          %853 = vmatprep.subr.mxu0 0.0
          %854 = vmatpush1.msra.mxu0 0.0
          %855 = vmatprep.subr.mxu0 0.0
          %856 = vmatpush1.msra.mxu0 0.0
          %857 = vmatprep.subr.mxu0 0.0
          %858 = vmatpush1.msra.mxu0 0.0
          %859 = vmatprep.subr.mxu0 0.0
          %860 = vmatpush1.msra.mxu0 0.0
          %861 = vmatprep.subr.mxu0 0.0
          %862 = vmatpush1.msra.mxu0 0.0
          %863 = vmatprep.subr.mxu0 0.0
          %864 = vmatpush1.msra.mxu0 0.0
          %865 = vmatprep.subr.mxu0 0.0
          %866 = vmatpush1.msra.mxu0 0.0
          %867 = vmatprep.subr.mxu0 0.0
          %868 = vmatpush1.msra.mxu0 0.0
          %869 = vmatprep.subr.mxu0 0.0
          %870 = vmatpush1.msra.mxu0 0.0
          %871 = vmatprep.subr.mxu0 0.0
          %872 = vmatpush1.msra.mxu0 0.0
          %873 = vmatprep.subr.mxu0 0.0
          %874 = vmatpush1.msra.mxu0 0.0
          %875 = vmatprep.subr.mxu0 0.0
          %876 = vmatpush1.msra.mxu0 0.0
          %877 = vmatprep.subr.mxu0 0.0
          %878 = vmatpush1.msra.mxu0 0.0
          %879 = vmatprep.subr.mxu0 0.0
          %880 = vmatpush1.msra.mxu0 0.0
          %881 = vmatprep.subr.mxu0 0.0
          %882 = vmatpush1.msra.mxu0 0.0
          %883 = vmatprep.subr.mxu0 0.0
          %884 = vmatpush1.msra.mxu0 0.0
          %885 = vmatprep.subr.mxu0 0.0
          %886 = vmatpush1.msra.mxu0 0.0
          %887 = vmatprep.subr.mxu0 0.0
          %888 = vmatpush1.msra.mxu0 0.0
          %889 = vmatprep.subr.mxu0 0.0
          %890 = vmatpush1.msra.mxu0 0.0
          %891 = vmatprep.subr.mxu0 0.0
          %892 = vmatpush1.msra.mxu0 0.0
          %893 = vmatprep.mubr.f32.mxu0 0.0
          %894 = vmatmul.mubr.f32.gmra.mrb[0].mxu0 %v754
          %v895 = vpop.f32.mrb[0].mxu0
          %v896 = vadd.f32 0.0, %v895
          %v897 = vpop.f32.mrb[0].mxu0
          %898 = vdwg.mxu0
          %v899 = vmul.f32 %v896, 0.25
          %v900 = vsub.f32 %v749, %v826
          %v901 = vand.u32 2147483647, %v900
          %vm902 = vcmask 27648
          %v903 = vsel %vm902, %v901, 0.0
          %904 = vadd.xlane.f32.xlu0 %v903
          %v905 = vpop.xlane.xlu0 %904
          %v906 = vrot.slane %v905, 4
          %v907 = vadd.f32 %v905, %v906
          %v908 = vrot.slane %v907, 2
          %v909 = vadd.f32 %v907, %v908
          %v910 = vrot.slane %v909, 1
          %v911 = vadd.f32 %v909, %v910
          %s912 = vtos %v911
          %v913 = vsub.f32 %v750, %v899
          %v914 = vand.u32 2147483647, %v913
          %v915 = vsel %vm902, %v914, 0.0
          %916 = vadd.xlane.f32.xlu0 %v915
          %v917 = vpop.xlane.xlu0 %916
          %v918 = vrot.slane %v917, 4
          %v919 = vadd.f32 %v917, %v918
          %v920 = vrot.slane %v919, 2
          %v921 = vadd.f32 %v919, %v920
          %v922 = vrot.slane %v921, 1
          %v923 = vadd.f32 %v921, %v922
          %s924 = vtos %v923
          %s925 = sadd.f32 %s912, %s924
          %vm926 = vcmp.eq.s32.totalorder %v725, 6
          %v927 = vstv %s925
          %v928 = vsel %vm926, %v927, %v743
          %929 = vst [vmem:[%s426] sm:$0xff] %v928
        $region128: #{flow_loss.1} parent=111 // pred_fallthru
          _
        %p930 = scmp.ne.s32.totalorder %s22, 1
        // Predicated region
        $region129: #{flow_loss.1} parent=111 // pred_check
          %p931 = pneg %p930
        $region130: #{flow_loss.1} parent=111 // pred_check_branch
          %933 = sbr.rel (%p931) target = $region132
        $region131: #{flow_loss.1} parent=111 // pred_region
          %934 = vst [vmem:[%s426] sm:$0xff] %v743
        $region132: #{flow_loss.1} parent=111 // pred_fallthru
          _
        %p935 = scmp.lt.s32.totalorder %s21, 1
        %s936 = scalar_select %p935, %s21, 1
        %p937 = scmp.lt.s32.totalorder %s22, 1
        %s938 = scalar_select %p937, %s22, 1
        %s939 = smul.addr %s936, 2
        %s940 = sadd.s32 %s938, %s939
        %s941 = smul.addr %s940, 8
        %s942 = scalar_lea.vmem %s6, %s941
        // Predicated region
        $region133: #{flow_loss.1} parent=111 // pred_check
          %p943 = pneg %p201
        $region134: #{flow_loss.1} parent=111 // pred_check_branch
          %945 = sbr.rel (%p943) target = $region136
        $region135: #{flow_loss.1} parent=111 // pred_region
          _
        $region136: #{flow_loss.1} parent=111 // pred_fallthru
          _
      $region112: #{flow_loss.1} parent=5 // pred_fallthru
        _
      %p946 = scmp.le.s32.totalorder 2, %s12
      // Predicated region
      $region137: #{flow_loss.1} parent=5 // pred_check
        %p947 = pneg %p946
      $region138: #{flow_loss.1} parent=5 // pred_check_branch
        %949 = sbr.rel (%p947) target = $region140
      $region139: #{flow_loss.1} parent=5 // pred_region
        %s950 = ssub.s32 %s12, 2
        // Predicated region
        $region141: #{flow_loss.1} parent=139 // pred_check
          %p951 = pneg %p207
        $region142: #{flow_loss.1} parent=139 // pred_check_branch
          %953 = sbr.rel (%p951) target = $region144
        $region143: #{flow_loss.1} parent=139 // pred_region
          %p954 = scmp.lt.s32.totalorder %s23, 1
          %s955 = scalar_select %p954, %s23, 1
          %p956 = scmp.lt.s32.totalorder %s24, 1
          %s957 = scalar_select %p956, %s24, 1
          %s958 = smul.addr %s955, 2
          %s959 = sadd.s32 %s957, %s958
          %s960 = smul.addr %s959, 8
          %s961 = scalar_lea.vmem %s6, %s960
        $region144: #{flow_loss.1} parent=139 // pred_fallthru
          _
      $region140: #{flow_loss.1} parent=5 // pred_fallthru
        _
    $region6: #{flow_loss.1} parent=1 // loop_footer
      %s16 = sadd.s32 1, %s12
    $region7: #{flow_loss.1} parent=1 // loop_footer_branch
      %11 = sbr.rel target = $region3
    $region8: #{flow_loss.1} parent=1 // loop_exit
      _

</llo_original>
